<compile_context>
chip_gen: v7x
topology: tpu7x:2x2x1
jax: 0.10.0
libtpu: 0.0.40
codegen_flags: <defaults>
</compile_context>

<pallas_src>
import math
import functools

import jax
import jax.numpy as jnp
from jax.experimental import pallas as pl
from jax.experimental.pallas import tpu as pltpu


def _round_up(x: int, m: int) -> int:
    return ((x + m - 1) // m) * m


def _embed_gather_kernel(ids_smem, emb_hbm, out_ref, gbuf, sems, *, tm, scale):
    """One grid step gathers `tm` embedding rows via manual DMA and scales them.

    ids_smem : (N_pad,) int32 token ids (scalar-prefetched into SMEM)
    emb_hbm  : (V, D_pad) f32 embedding table, left in HBM (memory_space=pl.ANY)
    out_ref  : (tm, D_pad) f32 output tile (auto-pipelined VMEM block)
    gbuf     : (2, tm, D_pad) f32 VMEM double-buffer for gathered rows
    sems     : (2, tm) DMA semaphores
    """
    i = pl.program_id(0)
    n_tiles = pl.num_programs(0)
    slot = i % 2

    def issue_tile(tile_idx, slot_idx):
        base = tile_idx * tm
        for j in range(tm):  # tm is a small static Python int
            tok = ids_smem[base + j]
            pltpu.make_async_copy(
                emb_hbm.at[pl.ds(tok, 1), :],
                gbuf.at[slot_idx, pl.ds(j, 1), :],
                sems.at[slot_idx, j],
            ).start()

    def wait_tile(slot_idx):
        for j in range(tm):
            pltpu.make_async_copy(
                emb_hbm.at[pl.ds(0, 1), :],
                gbuf.at[slot_idx, pl.ds(j, 1), :],
                sems.at[slot_idx, j],
            ).wait()

    # Prime the pipeline on the first tile.
    @pl.when(i == 0)
    def _():
        issue_tile(i, slot)

    # Prefetch the next tile's rows into the other buffer before waiting on this one.
    @pl.when(i + 1 < n_tiles)
    def _():
        issue_tile(i + 1, 1 - slot)

    wait_tile(slot)
    out_ref[...] = gbuf[slot] * scale


def input_embedding(ids, emb_table, *, block_tokens=128):
    """Equivalent of InputEmbedding.forward: embedding(ids) * sqrt(d_model)."""
    B, S = ids.shape
    V, D = emb_table.shape
    N = B * S
    scale = math.sqrt(D)  # scale uses the true model dimension

    # Lane-dense output / DMA rows: pad the model dim up to a multiple of 128.
    D_pad = _round_up(D, 128)
    if D_pad != D:
        emb_table = jnp.pad(emb_table, ((0, 0), (0, D_pad - D)))
    emb_table = emb_table.astype(jnp.float32)

    # Tile the token axis; pad token count to a multiple of the tile.
    tm = min(block_tokens, _round_up(N, 8))
    N_pad = _round_up(N, tm)
    n_tiles = N_pad // tm

    # Clamp ids so the row DMA can never go out of bounds.
    # TODO(synk): nn.Embedding raises on out-of-range ids; here they are clamped to [0, V-1].
    ids_flat = jnp.clip(ids.reshape(-1).astype(jnp.int32), 0, V - 1)
    if N_pad != N:
        ids_flat = jnp.pad(ids_flat, (0, N_pad - N))

    kernel = functools.partial(_embed_gather_kernel, tm=tm, scale=scale)

    out_flat = pl.pallas_call(
        kernel,
        out_shape=jax.ShapeDtypeStruct((N_pad, D_pad), jnp.float32),
        grid_spec=pltpu.PrefetchScalarGridSpec(
            num_scalar_prefetch=1,            # ids -> SMEM
            grid=(n_tiles,),
            in_specs=[pl.BlockSpec(memory_space=pl.ANY)],  # table stays in HBM
            out_specs=pl.BlockSpec((tm, D_pad), lambda i, ids_ref: (i, 0)),
            scratch_shapes=[
                pltpu.VMEM((2, tm, D_pad), jnp.float32),   # double-buffered gather rows
                pltpu.SemaphoreType.DMA((2, tm)),
            ],
        ),
        compiler_params=pltpu.CompilerParams(
            # Cross-step prefetch relies on sequential grid execution.
            dimension_semantics=("arbitrary",),
        ),
    )(ids_flat, emb_table)

    return out_flat[:N, :D].reshape(B, S, D)


if __name__ == "__main__":
    # Small, deterministic setup consistent with the module's __init__.
    vocab_size = 32
    d_model = 32
    batch, seq = 2, 8

    key = jax.random.PRNGKey(0)
    k_emb, k_ids = jax.random.split(key)

    # Deterministic parameter init (nn.Embedding default ~ N(0, 1)).
    emb_table = jax.random.normal(k_emb, (vocab_size, d_model), dtype=jnp.float32)
    ids = jax.random.randint(k_ids, (batch, seq), 0, vocab_size, dtype=jnp.int32)

    out = input_embedding(ids, emb_table)
    out = jax.block_until_ready(out)

    # Reference check (plain JAX gather + scale).
    ref = jnp.take(emb_table, ids, axis=0) * math.sqrt(d_model)
    assert out.shape == (batch, seq, d_model)
    assert jnp.allclose(out, ref, atol=1e-5, rtol=1e-5)

    print("KERNEL_OK")
</pallas_src>

<mosaic_0001>
module attributes {stable_mosaic.version = 11 : i64} {
  func.func @_embed_gather_kernel(%arg0: i32, %arg1: memref<16xi32, #tpu.memory_space<smem>>, %arg2: memref<32x128xf32, #tpu.memory_space<any>>, %arg3: memref<16x128xf32, #tpu.memory_space<vmem>>, %arg4: memref<2x16x128xf32, #tpu.memory_space<vmem>>, %arg5: memref<2x16x!tpu.dma_semaphore, #tpu.memory_space<semaphore_mem>>) attributes {dimension_semantics = [#tpu.dimension_semantics<arbitrary>], iteration_bounds = array<i64: 1>, scalar_prefetch = 1 : i64, scratch_operands = 2 : i64, tpu.core_type = #tpu.core_type<tc>, window_params = [{}, {transform_indices = @transform_1, window_bounds = array<i64: 16, 128>}]} {
    %c2_i32 = arith.constant 2 : i32
    %c0_i32 = arith.constant 0 : i32
    %0 = arith.cmpi eq, %c2_i32, %c0_i32 : i32
    %c1_i32 = arith.constant 1 : i32
    %1 = arith.select %0, %c1_i32, %c2_i32 : i32
    %2 = arith.remsi %arg0, %1 : i32
    %c0_i32_0 = arith.constant 0 : i32
    %3 = arith.cmpi ne, %2, %c0_i32_0 : i32
    %c0_i32_1 = arith.constant 0 : i32
    %4 = arith.cmpi slt, %2, %c0_i32_1 : i32
    %c0_i32_2 = arith.constant 0 : i32
    %5 = arith.cmpi slt, %1, %c0_i32_2 : i32
    %6 = arith.xori %4, %5 : i1
    %7 = arith.andi %6, %3 : i1
    %8 = arith.addi %2, %1 : i32
    %9 = arith.select %7, %8, %2 : i32
    %c0_i32_3 = arith.constant 0 : i32
    %10 = arith.cmpi eq, %arg0, %c0_i32_3 : i32
    %11 = arith.extui %10 : i1 to i32
    %c0_i32_4 = arith.constant 0 : i32
    %12 = arith.cmpi ne, %11, %c0_i32_4 : i32
    scf.if %12 {
      %c16_i32 = arith.constant 16 : i32
      %103 = arith.muli %arg0, %c16_i32 : i32
      %c0_i32_78 = arith.constant 0 : i32
      %104 = arith.addi %103, %c0_i32_78 : i32
      %105 = arith.index_cast %104 : i32 to index
      %106 = memref.load %arg1[%105] : memref<16xi32, #tpu.memory_space<smem>>
      %c0_i32_79 = arith.constant 0 : i32
      %c0_i32_80 = arith.constant 0 : i32
      %107 = tpu.memref_slice %arg2[%106, %c0_i32_80] : memref<32x128xf32, #tpu.memory_space<any>> -> memref<1x128xf32, #tpu.memory_space<any>>
      %c0_i32_81 = arith.constant 0 : i32
      %c0_i32_82 = arith.constant 0 : i32
      %108 = tpu.memref_slice %arg4[%9, %c0_i32_81, %c0_i32_82] : memref<2x16x128xf32, #tpu.memory_space<vmem>> -> memref<1x1x128xf32, #tpu.memory_space<vmem>>
      %109 = tpu.memref_squeeze %108 : memref<1x1x128xf32, #tpu.memory_space<vmem>> -> memref<1x128xf32, #tpu.memory_space<vmem>>
      %110 = tpu.memref_slice %arg5[%9, %c0_i32_79] : memref<2x16x!tpu.dma_semaphore, #tpu.memory_space<semaphore_mem>> -> memref<1x1x!tpu.dma_semaphore, #tpu.memory_space<semaphore_mem>>
      %111 = tpu.memref_squeeze %110 : memref<1x1x!tpu.dma_semaphore, #tpu.memory_space<semaphore_mem>> -> memref<!tpu.dma_semaphore, #tpu.memory_space<semaphore_mem>>
      tpu.enqueue_dma source(%107 : memref<1x128xf32, #tpu.memory_space<any>>) target(%109 : memref<1x128xf32, #tpu.memory_space<vmem>>) target_semaphore(%111 : memref<!tpu.dma_semaphore, #tpu.memory_space<semaphore_mem>>)
      %c1_i32_83 = arith.constant 1 : i32
      %112 = arith.addi %103, %c1_i32_83 : i32
      %113 = arith.index_cast %112 : i32 to index
      %114 = memref.load %arg1[%113] : memref<16xi32, #tpu.memory_space<smem>>
      %c1_i32_84 = arith.constant 1 : i32
      %c0_i32_85 = arith.constant 0 : i32
      %115 = tpu.memref_slice %arg2[%114, %c0_i32_85] : memref<32x128xf32, #tpu.memory_space<any>> -> memref<1x128xf32, #tpu.memory_space<any>>
      %c1_i32_86 = arith.constant 1 : i32
      %c0_i32_87 = arith.constant 0 : i32
      %116 = tpu.memref_slice %arg4[%9, %c1_i32_86, %c0_i32_87] : memref<2x16x128xf32, #tpu.memory_space<vmem>> -> memref<1x1x128xf32, #tpu.memory_space<vmem>>
      %117 = tpu.memref_squeeze %116 : memref<1x1x128xf32, #tpu.memory_space<vmem>> -> memref<1x128xf32, #tpu.memory_space<vmem>>
      %118 = tpu.memref_slice %arg5[%9, %c1_i32_84] : memref<2x16x!tpu.dma_semaphore, #tpu.memory_space<semaphore_mem>> -> memref<1x1x!tpu.dma_semaphore, #tpu.memory_space<semaphore_mem>>
      %119 = tpu.memref_squeeze %118 : memref<1x1x!tpu.dma_semaphore, #tpu.memory_space<semaphore_mem>> -> memref<!tpu.dma_semaphore, #tpu.memory_space<semaphore_mem>>
      tpu.enqueue_dma source(%115 : memref<1x128xf32, #tpu.memory_space<any>>) target(%117 : memref<1x128xf32, #tpu.memory_space<vmem>>) target_semaphore(%119 : memref<!tpu.dma_semaphore, #tpu.memory_space<semaphore_mem>>)
      %c2_i32_88 = arith.constant 2 : i32
      %120 = arith.addi %103, %c2_i32_88 : i32
      %121 = arith.index_cast %120 : i32 to index
      %122 = memref.load %arg1[%121] : memref<16xi32, #tpu.memory_space<smem>>
      %c2_i32_89 = arith.constant 2 : i32
      %c0_i32_90 = arith.constant 0 : i32
      %123 = tpu.memref_slice %arg2[%122, %c0_i32_90] : memref<32x128xf32, #tpu.memory_space<any>> -> memref<1x128xf32, #tpu.memory_space<any>>
      %c2_i32_91 = arith.constant 2 : i32
      %c0_i32_92 = arith.constant 0 : i32
      %124 = tpu.memref_slice %arg4[%9, %c2_i32_91, %c0_i32_92] : memref<2x16x128xf32, #tpu.memory_space<vmem>> -> memref<1x1x128xf32, #tpu.memory_space<vmem>>
      %125 = tpu.memref_squeeze %124 : memref<1x1x128xf32, #tpu.memory_space<vmem>> -> memref<1x128xf32, #tpu.memory_space<vmem>>
      %126 = tpu.memref_slice %arg5[%9, %c2_i32_89] : memref<2x16x!tpu.dma_semaphore, #tpu.memory_space<semaphore_mem>> -> memref<1x1x!tpu.dma_semaphore, #tpu.memory_space<semaphore_mem>>
      %127 = tpu.memref_squeeze %126 : memref<1x1x!tpu.dma_semaphore, #tpu.memory_space<semaphore_mem>> -> memref<!tpu.dma_semaphore, #tpu.memory_space<semaphore_mem>>
      tpu.enqueue_dma source(%123 : memref<1x128xf32, #tpu.memory_space<any>>) target(%125 : memref<1x128xf32, #tpu.memory_space<vmem>>) target_semaphore(%127 : memref<!tpu.dma_semaphore, #tpu.memory_space<semaphore_mem>>)
      %c3_i32_93 = arith.constant 3 : i32
      %128 = arith.addi %103, %c3_i32_93 : i32
      %129 = arith.index_cast %128 : i32 to index
      %130 = memref.load %arg1[%129] : memref<16xi32, #tpu.memory_space<smem>>
      %c3_i32_94 = arith.constant 3 : i32
      %c0_i32_95 = arith.constant 0 : i32
      %131 = tpu.memref_slice %arg2[%130, %c0_i32_95] : memref<32x128xf32, #tpu.memory_space<any>> -> memref<1x128xf32, #tpu.memory_space<any>>
      %c3_i32_96 = arith.constant 3 : i32
      %c0_i32_97 = arith.constant 0 : i32
      %132 = tpu.memref_slice %arg4[%9, %c3_i32_96, %c0_i32_97] : memref<2x16x128xf32, #tpu.memory_space<vmem>> -> memref<1x1x128xf32, #tpu.memory_space<vmem>>
      %133 = tpu.memref_squeeze %132 : memref<1x1x128xf32, #tpu.memory_space<vmem>> -> memref<1x128xf32, #tpu.memory_space<vmem>>
      %134 = tpu.memref_slice %arg5[%9, %c3_i32_94] : memref<2x16x!tpu.dma_semaphore, #tpu.memory_space<semaphore_mem>> -> memref<1x1x!tpu.dma_semaphore, #tpu.memory_space<semaphore_mem>>
      %135 = tpu.memref_squeeze %134 : memref<1x1x!tpu.dma_semaphore, #tpu.memory_space<semaphore_mem>> -> memref<!tpu.dma_semaphore, #tpu.memory_space<semaphore_mem>>
      tpu.enqueue_dma source(%131 : memref<1x128xf32, #tpu.memory_space<any>>) target(%133 : memref<1x128xf32, #tpu.memory_space<vmem>>) target_semaphore(%135 : memref<!tpu.dma_semaphore, #tpu.memory_space<semaphore_mem>>)
      %c4_i32_98 = arith.constant 4 : i32
      %136 = arith.addi %103, %c4_i32_98 : i32
      %137 = arith.index_cast %136 : i32 to index
      %138 = memref.load %arg1[%137] : memref<16xi32, #tpu.memory_space<smem>>
      %c4_i32_99 = arith.constant 4 : i32
      %c0_i32_100 = arith.constant 0 : i32
      %139 = tpu.memref_slice %arg2[%138, %c0_i32_100] : memref<32x128xf32, #tpu.memory_space<any>> -> memref<1x128xf32, #tpu.memory_space<any>>
      %c4_i32_101 = arith.constant 4 : i32
      %c0_i32_102 = arith.constant 0 : i32
      %140 = tpu.memref_slice %arg4[%9, %c4_i32_101, %c0_i32_102] : memref<2x16x128xf32, #tpu.memory_space<vmem>> -> memref<1x1x128xf32, #tpu.memory_space<vmem>>
      %141 = tpu.memref_squeeze %140 : memref<1x1x128xf32, #tpu.memory_space<vmem>> -> memref<1x128xf32, #tpu.memory_space<vmem>>
      %142 = tpu.memref_slice %arg5[%9, %c4_i32_99] : memref<2x16x!tpu.dma_semaphore, #tpu.memory_space<semaphore_mem>> -> memref<1x1x!tpu.dma_semaphore, #tpu.memory_space<semaphore_mem>>
      %143 = tpu.memref_squeeze %142 : memref<1x1x!tpu.dma_semaphore, #tpu.memory_space<semaphore_mem>> -> memref<!tpu.dma_semaphore, #tpu.memory_space<semaphore_mem>>
      tpu.enqueue_dma source(%139 : memref<1x128xf32, #tpu.memory_space<any>>) target(%141 : memref<1x128xf32, #tpu.memory_space<vmem>>) target_semaphore(%143 : memref<!tpu.dma_semaphore, #tpu.memory_space<semaphore_mem>>)
      %c5_i32_103 = arith.constant 5 : i32
      %144 = arith.addi %103, %c5_i32_103 : i32
      %145 = arith.index_cast %144 : i32 to index
      %146 = memref.load %arg1[%145] : memref<16xi32, #tpu.memory_space<smem>>
      %c5_i32_104 = arith.constant 5 : i32
      %c0_i32_105 = arith.constant 0 : i32
      %147 = tpu.memref_slice %arg2[%146, %c0_i32_105] : memref<32x128xf32, #tpu.memory_space<any>> -> memref<1x128xf32, #tpu.memory_space<any>>
      %c5_i32_106 = arith.constant 5 : i32
      %c0_i32_107 = arith.constant 0 : i32
      %148 = tpu.memref_slice %arg4[%9, %c5_i32_106, %c0_i32_107] : memref<2x16x128xf32, #tpu.memory_space<vmem>> -> memref<1x1x128xf32, #tpu.memory_space<vmem>>
      %149 = tpu.memref_squeeze %148 : memref<1x1x128xf32, #tpu.memory_space<vmem>> -> memref<1x128xf32, #tpu.memory_space<vmem>>
      %150 = tpu.memref_slice %arg5[%9, %c5_i32_104] : memref<2x16x!tpu.dma_semaphore, #tpu.memory_space<semaphore_mem>> -> memref<1x1x!tpu.dma_semaphore, #tpu.memory_space<semaphore_mem>>
      %151 = tpu.memref_squeeze %150 : memref<1x1x!tpu.dma_semaphore, #tpu.memory_space<semaphore_mem>> -> memref<!tpu.dma_semaphore, #tpu.memory_space<semaphore_mem>>
      tpu.enqueue_dma source(%147 : memref<1x128xf32, #tpu.memory_space<any>>) target(%149 : memref<1x128xf32, #tpu.memory_space<vmem>>) target_semaphore(%151 : memref<!tpu.dma_semaphore, #tpu.memory_space<semaphore_mem>>)
      %c6_i32_108 = arith.constant 6 : i32
      %152 = arith.addi %103, %c6_i32_108 : i32
      %153 = arith.index_cast %152 : i32 to index
      %154 = memref.load %arg1[%153] : memref<16xi32, #tpu.memory_space<smem>>
      %c6_i32_109 = arith.constant 6 : i32
      %c0_i32_110 = arith.constant 0 : i32
      %155 = tpu.memref_slice %arg2[%154, %c0_i32_110] : memref<32x128xf32, #tpu.memory_space<any>> -> memref<1x128xf32, #tpu.memory_space<any>>
      %c6_i32_111 = arith.constant 6 : i32
      %c0_i32_112 = arith.constant 0 : i32
      %156 = tpu.memref_slice %arg4[%9, %c6_i32_111, %c0_i32_112] : memref<2x16x128xf32, #tpu.memory_space<vmem>> -> memref<1x1x128xf32, #tpu.memory_space<vmem>>
      %157 = tpu.memref_squeeze %156 : memref<1x1x128xf32, #tpu.memory_space<vmem>> -> memref<1x128xf32, #tpu.memory_space<vmem>>
      %158 = tpu.memref_slice %arg5[%9, %c6_i32_109] : memref<2x16x!tpu.dma_semaphore, #tpu.memory_space<semaphore_mem>> -> memref<1x1x!tpu.dma_semaphore, #tpu.memory_space<semaphore_mem>>
      %159 = tpu.memref_squeeze %158 : memref<1x1x!tpu.dma_semaphore, #tpu.memory_space<semaphore_mem>> -> memref<!tpu.dma_semaphore, #tpu.memory_space<semaphore_mem>>
      tpu.enqueue_dma source(%155 : memref<1x128xf32, #tpu.memory_space<any>>) target(%157 : memref<1x128xf32, #tpu.memory_space<vmem>>) target_semaphore(%159 : memref<!tpu.dma_semaphore, #tpu.memory_space<semaphore_mem>>)
      %c7_i32_113 = arith.constant 7 : i32
      %160 = arith.addi %103, %c7_i32_113 : i32
      %161 = arith.index_cast %160 : i32 to index
      %162 = memref.load %arg1[%161] : memref<16xi32, #tpu.memory_space<smem>>
      %c7_i32_114 = arith.constant 7 : i32
      %c0_i32_115 = arith.constant 0 : i32
      %163 = tpu.memref_slice %arg2[%162, %c0_i32_115] : memref<32x128xf32, #tpu.memory_space<any>> -> memref<1x128xf32, #tpu.memory_space<any>>
      %c7_i32_116 = arith.constant 7 : i32
      %c0_i32_117 = arith.constant 0 : i32
      %164 = tpu.memref_slice %arg4[%9, %c7_i32_116, %c0_i32_117] : memref<2x16x128xf32, #tpu.memory_space<vmem>> -> memref<1x1x128xf32, #tpu.memory_space<vmem>>
      %165 = tpu.memref_squeeze %164 : memref<1x1x128xf32, #tpu.memory_space<vmem>> -> memref<1x128xf32, #tpu.memory_space<vmem>>
      %166 = tpu.memref_slice %arg5[%9, %c7_i32_114] : memref<2x16x!tpu.dma_semaphore, #tpu.memory_space<semaphore_mem>> -> memref<1x1x!tpu.dma_semaphore, #tpu.memory_space<semaphore_mem>>
      %167 = tpu.memref_squeeze %166 : memref<1x1x!tpu.dma_semaphore, #tpu.memory_space<semaphore_mem>> -> memref<!tpu.dma_semaphore, #tpu.memory_space<semaphore_mem>>
      tpu.enqueue_dma source(%163 : memref<1x128xf32, #tpu.memory_space<any>>) target(%165 : memref<1x128xf32, #tpu.memory_space<vmem>>) target_semaphore(%167 : memref<!tpu.dma_semaphore, #tpu.memory_space<semaphore_mem>>)
      %c8_i32_118 = arith.constant 8 : i32
      %168 = arith.addi %103, %c8_i32_118 : i32
      %169 = arith.index_cast %168 : i32 to index
      %170 = memref.load %arg1[%169] : memref<16xi32, #tpu.memory_space<smem>>
      %c8_i32_119 = arith.constant 8 : i32
      %c0_i32_120 = arith.constant 0 : i32
      %171 = tpu.memref_slice %arg2[%170, %c0_i32_120] : memref<32x128xf32, #tpu.memory_space<any>> -> memref<1x128xf32, #tpu.memory_space<any>>
      %c8_i32_121 = arith.constant 8 : i32
      %c0_i32_122 = arith.constant 0 : i32
      %172 = tpu.memref_slice %arg4[%9, %c8_i32_121, %c0_i32_122] : memref<2x16x128xf32, #tpu.memory_space<vmem>> -> memref<1x1x128xf32, #tpu.memory_space<vmem>>
      %173 = tpu.memref_squeeze %172 : memref<1x1x128xf32, #tpu.memory_space<vmem>> -> memref<1x128xf32, #tpu.memory_space<vmem>>
      %174 = tpu.memref_slice %arg5[%9, %c8_i32_119] : memref<2x16x!tpu.dma_semaphore, #tpu.memory_space<semaphore_mem>> -> memref<1x1x!tpu.dma_semaphore, #tpu.memory_space<semaphore_mem>>
      %175 = tpu.memref_squeeze %174 : memref<1x1x!tpu.dma_semaphore, #tpu.memory_space<semaphore_mem>> -> memref<!tpu.dma_semaphore, #tpu.memory_space<semaphore_mem>>
      tpu.enqueue_dma source(%171 : memref<1x128xf32, #tpu.memory_space<any>>) target(%173 : memref<1x128xf32, #tpu.memory_space<vmem>>) target_semaphore(%175 : memref<!tpu.dma_semaphore, #tpu.memory_space<semaphore_mem>>)
      %c9_i32_123 = arith.constant 9 : i32
      %176 = arith.addi %103, %c9_i32_123 : i32
      %177 = arith.index_cast %176 : i32 to index
      %178 = memref.load %arg1[%177] : memref<16xi32, #tpu.memory_space<smem>>
      %c9_i32_124 = arith.constant 9 : i32
      %c0_i32_125 = arith.constant 0 : i32
      %179 = tpu.memref_slice %arg2[%178, %c0_i32_125] : memref<32x128xf32, #tpu.memory_space<any>> -> memref<1x128xf32, #tpu.memory_space<any>>
      %c9_i32_126 = arith.constant 9 : i32
      %c0_i32_127 = arith.constant 0 : i32
      %180 = tpu.memref_slice %arg4[%9, %c9_i32_126, %c0_i32_127] : memref<2x16x128xf32, #tpu.memory_space<vmem>> -> memref<1x1x128xf32, #tpu.memory_space<vmem>>
      %181 = tpu.memref_squeeze %180 : memref<1x1x128xf32, #tpu.memory_space<vmem>> -> memref<1x128xf32, #tpu.memory_space<vmem>>
      %182 = tpu.memref_slice %arg5[%9, %c9_i32_124] : memref<2x16x!tpu.dma_semaphore, #tpu.memory_space<semaphore_mem>> -> memref<1x1x!tpu.dma_semaphore, #tpu.memory_space<semaphore_mem>>
      %183 = tpu.memref_squeeze %182 : memref<1x1x!tpu.dma_semaphore, #tpu.memory_space<semaphore_mem>> -> memref<!tpu.dma_semaphore, #tpu.memory_space<semaphore_mem>>
      tpu.enqueue_dma source(%179 : memref<1x128xf32, #tpu.memory_space<any>>) target(%181 : memref<1x128xf32, #tpu.memory_space<vmem>>) target_semaphore(%183 : memref<!tpu.dma_semaphore, #tpu.memory_space<semaphore_mem>>)
      %c10_i32_128 = arith.constant 10 : i32
      %184 = arith.addi %103, %c10_i32_128 : i32
      %185 = arith.index_cast %184 : i32 to index
      %186 = memref.load %arg1[%185] : memref<16xi32, #tpu.memory_space<smem>>
      %c10_i32_129 = arith.constant 10 : i32
      %c0_i32_130 = arith.constant 0 : i32
      %187 = tpu.memref_slice %arg2[%186, %c0_i32_130] : memref<32x128xf32, #tpu.memory_space<any>> -> memref<1x128xf32, #tpu.memory_space<any>>
      %c10_i32_131 = arith.constant 10 : i32
      %c0_i32_132 = arith.constant 0 : i32
      %188 = tpu.memref_slice %arg4[%9, %c10_i32_131, %c0_i32_132] : memref<2x16x128xf32, #tpu.memory_space<vmem>> -> memref<1x1x128xf32, #tpu.memory_space<vmem>>
      %189 = tpu.memref_squeeze %188 : memref<1x1x128xf32, #tpu.memory_space<vmem>> -> memref<1x128xf32, #tpu.memory_space<vmem>>
      %190 = tpu.memref_slice %arg5[%9, %c10_i32_129] : memref<2x16x!tpu.dma_semaphore, #tpu.memory_space<semaphore_mem>> -> memref<1x1x!tpu.dma_semaphore, #tpu.memory_space<semaphore_mem>>
      %191 = tpu.memref_squeeze %190 : memref<1x1x!tpu.dma_semaphore, #tpu.memory_space<semaphore_mem>> -> memref<!tpu.dma_semaphore, #tpu.memory_space<semaphore_mem>>
      tpu.enqueue_dma source(%187 : memref<1x128xf32, #tpu.memory_space<any>>) target(%189 : memref<1x128xf32, #tpu.memory_space<vmem>>) target_semaphore(%191 : memref<!tpu.dma_semaphore, #tpu.memory_space<semaphore_mem>>)
      %c11_i32_133 = arith.constant 11 : i32
      %192 = arith.addi %103, %c11_i32_133 : i32
      %193 = arith.index_cast %192 : i32 to index
      %194 = memref.load %arg1[%193] : memref<16xi32, #tpu.memory_space<smem>>
      %c11_i32_134 = arith.constant 11 : i32
      %c0_i32_135 = arith.constant 0 : i32
      %195 = tpu.memref_slice %arg2[%194, %c0_i32_135] : memref<32x128xf32, #tpu.memory_space<any>> -> memref<1x128xf32, #tpu.memory_space<any>>
      %c11_i32_136 = arith.constant 11 : i32
      %c0_i32_137 = arith.constant 0 : i32
      %196 = tpu.memref_slice %arg4[%9, %c11_i32_136, %c0_i32_137] : memref<2x16x128xf32, #tpu.memory_space<vmem>> -> memref<1x1x128xf32, #tpu.memory_space<vmem>>
      %197 = tpu.memref_squeeze %196 : memref<1x1x128xf32, #tpu.memory_space<vmem>> -> memref<1x128xf32, #tpu.memory_space<vmem>>
      %198 = tpu.memref_slice %arg5[%9, %c11_i32_134] : memref<2x16x!tpu.dma_semaphore, #tpu.memory_space<semaphore_mem>> -> memref<1x1x!tpu.dma_semaphore, #tpu.memory_space<semaphore_mem>>
      %199 = tpu.memref_squeeze %198 : memref<1x1x!tpu.dma_semaphore, #tpu.memory_space<semaphore_mem>> -> memref<!tpu.dma_semaphore, #tpu.memory_space<semaphore_mem>>
      tpu.enqueue_dma source(%195 : memref<1x128xf32, #tpu.memory_space<any>>) target(%197 : memref<1x128xf32, #tpu.memory_space<vmem>>) target_semaphore(%199 : memref<!tpu.dma_semaphore, #tpu.memory_space<semaphore_mem>>)
      %c12_i32_138 = arith.constant 12 : i32
      %200 = arith.addi %103, %c12_i32_138 : i32
      %201 = arith.index_cast %200 : i32 to index
      %202 = memref.load %arg1[%201] : memref<16xi32, #tpu.memory_space<smem>>
      %c12_i32_139 = arith.constant 12 : i32
      %c0_i32_140 = arith.constant 0 : i32
      %203 = tpu.memref_slice %arg2[%202, %c0_i32_140] : memref<32x128xf32, #tpu.memory_space<any>> -> memref<1x128xf32, #tpu.memory_space<any>>
      %c12_i32_141 = arith.constant 12 : i32
      %c0_i32_142 = arith.constant 0 : i32
      %204 = tpu.memref_slice %arg4[%9, %c12_i32_141, %c0_i32_142] : memref<2x16x128xf32, #tpu.memory_space<vmem>> -> memref<1x1x128xf32, #tpu.memory_space<vmem>>
      %205 = tpu.memref_squeeze %204 : memref<1x1x128xf32, #tpu.memory_space<vmem>> -> memref<1x128xf32, #tpu.memory_space<vmem>>
      %206 = tpu.memref_slice %arg5[%9, %c12_i32_139] : memref<2x16x!tpu.dma_semaphore, #tpu.memory_space<semaphore_mem>> -> memref<1x1x!tpu.dma_semaphore, #tpu.memory_space<semaphore_mem>>
      %207 = tpu.memref_squeeze %206 : memref<1x1x!tpu.dma_semaphore, #tpu.memory_space<semaphore_mem>> -> memref<!tpu.dma_semaphore, #tpu.memory_space<semaphore_mem>>
      tpu.enqueue_dma source(%203 : memref<1x128xf32, #tpu.memory_space<any>>) target(%205 : memref<1x128xf32, #tpu.memory_space<vmem>>) target_semaphore(%207 : memref<!tpu.dma_semaphore, #tpu.memory_space<semaphore_mem>>)
      %c13_i32_143 = arith.constant 13 : i32
      %208 = arith.addi %103, %c13_i32_143 : i32
      %209 = arith.index_cast %208 : i32 to index
      %210 = memref.load %arg1[%209] : memref<16xi32, #tpu.memory_space<smem>>
      %c13_i32_144 = arith.constant 13 : i32
      %c0_i32_145 = arith.constant 0 : i32
      %211 = tpu.memref_slice %arg2[%210, %c0_i32_145] : memref<32x128xf32, #tpu.memory_space<any>> -> memref<1x128xf32, #tpu.memory_space<any>>
      %c13_i32_146 = arith.constant 13 : i32
      %c0_i32_147 = arith.constant 0 : i32
      %212 = tpu.memref_slice %arg4[%9, %c13_i32_146, %c0_i32_147] : memref<2x16x128xf32, #tpu.memory_space<vmem>> -> memref<1x1x128xf32, #tpu.memory_space<vmem>>
      %213 = tpu.memref_squeeze %212 : memref<1x1x128xf32, #tpu.memory_space<vmem>> -> memref<1x128xf32, #tpu.memory_space<vmem>>
      %214 = tpu.memref_slice %arg5[%9, %c13_i32_144] : memref<2x16x!tpu.dma_semaphore, #tpu.memory_space<semaphore_mem>> -> memref<1x1x!tpu.dma_semaphore, #tpu.memory_space<semaphore_mem>>
      %215 = tpu.memref_squeeze %214 : memref<1x1x!tpu.dma_semaphore, #tpu.memory_space<semaphore_mem>> -> memref<!tpu.dma_semaphore, #tpu.memory_space<semaphore_mem>>
      tpu.enqueue_dma source(%211 : memref<1x128xf32, #tpu.memory_space<any>>) target(%213 : memref<1x128xf32, #tpu.memory_space<vmem>>) target_semaphore(%215 : memref<!tpu.dma_semaphore, #tpu.memory_space<semaphore_mem>>)
      %c14_i32_148 = arith.constant 14 : i32
      %216 = arith.addi %103, %c14_i32_148 : i32
      %217 = arith.index_cast %216 : i32 to index
      %218 = memref.load %arg1[%217] : memref<16xi32, #tpu.memory_space<smem>>
      %c14_i32_149 = arith.constant 14 : i32
      %c0_i32_150 = arith.constant 0 : i32
      %219 = tpu.memref_slice %arg2[%218, %c0_i32_150] : memref<32x128xf32, #tpu.memory_space<any>> -> memref<1x128xf32, #tpu.memory_space<any>>
      %c14_i32_151 = arith.constant 14 : i32
      %c0_i32_152 = arith.constant 0 : i32
      %220 = tpu.memref_slice %arg4[%9, %c14_i32_151, %c0_i32_152] : memref<2x16x128xf32, #tpu.memory_space<vmem>> -> memref<1x1x128xf32, #tpu.memory_space<vmem>>
      %221 = tpu.memref_squeeze %220 : memref<1x1x128xf32, #tpu.memory_space<vmem>> -> memref<1x128xf32, #tpu.memory_space<vmem>>
      %222 = tpu.memref_slice %arg5[%9, %c14_i32_149] : memref<2x16x!tpu.dma_semaphore, #tpu.memory_space<semaphore_mem>> -> memref<1x1x!tpu.dma_semaphore, #tpu.memory_space<semaphore_mem>>
      %223 = tpu.memref_squeeze %222 : memref<1x1x!tpu.dma_semaphore, #tpu.memory_space<semaphore_mem>> -> memref<!tpu.dma_semaphore, #tpu.memory_space<semaphore_mem>>
      tpu.enqueue_dma source(%219 : memref<1x128xf32, #tpu.memory_space<any>>) target(%221 : memref<1x128xf32, #tpu.memory_space<vmem>>) target_semaphore(%223 : memref<!tpu.dma_semaphore, #tpu.memory_space<semaphore_mem>>)
      %c15_i32_153 = arith.constant 15 : i32
      %224 = arith.addi %103, %c15_i32_153 : i32
      %225 = arith.index_cast %224 : i32 to index
      %226 = memref.load %arg1[%225] : memref<16xi32, #tpu.memory_space<smem>>
      %c15_i32_154 = arith.constant 15 : i32
      %c0_i32_155 = arith.constant 0 : i32
      %227 = tpu.memref_slice %arg2[%226, %c0_i32_155] : memref<32x128xf32, #tpu.memory_space<any>> -> memref<1x128xf32, #tpu.memory_space<any>>
      %c15_i32_156 = arith.constant 15 : i32
      %c0_i32_157 = arith.constant 0 : i32
      %228 = tpu.memref_slice %arg4[%9, %c15_i32_156, %c0_i32_157] : memref<2x16x128xf32, #tpu.memory_space<vmem>> -> memref<1x1x128xf32, #tpu.memory_space<vmem>>
      %229 = tpu.memref_squeeze %228 : memref<1x1x128xf32, #tpu.memory_space<vmem>> -> memref<1x128xf32, #tpu.memory_space<vmem>>
      %230 = tpu.memref_slice %arg5[%9, %c15_i32_154] : memref<2x16x!tpu.dma_semaphore, #tpu.memory_space<semaphore_mem>> -> memref<1x1x!tpu.dma_semaphore, #tpu.memory_space<semaphore_mem>>
      %231 = tpu.memref_squeeze %230 : memref<1x1x!tpu.dma_semaphore, #tpu.memory_space<semaphore_mem>> -> memref<!tpu.dma_semaphore, #tpu.memory_space<semaphore_mem>>
      tpu.enqueue_dma source(%227 : memref<1x128xf32, #tpu.memory_space<any>>) target(%229 : memref<1x128xf32, #tpu.memory_space<vmem>>) target_semaphore(%231 : memref<!tpu.dma_semaphore, #tpu.memory_space<semaphore_mem>>)
    } else {
    }
    %c1_i32_5 = arith.constant 1 : i32
    %13 = arith.addi %arg0, %c1_i32_5 : i32
    %c1_i32_6 = arith.constant 1 : i32
    %14 = arith.cmpi slt, %13, %c1_i32_6 : i32
    %15 = arith.extui %14 : i1 to i32
    %c0_i32_7 = arith.constant 0 : i32
    %16 = arith.cmpi ne, %15, %c0_i32_7 : i32
    scf.if %16 {
      %c1_i32_78 = arith.constant 1 : i32
      %103 = arith.addi %arg0, %c1_i32_78 : i32
      %c1_i32_79 = arith.constant 1 : i32
      %104 = arith.subi %c1_i32_79, %9 : i32
      %c16_i32 = arith.constant 16 : i32
      %105 = arith.muli %103, %c16_i32 : i32
      %c0_i32_80 = arith.constant 0 : i32
      %106 = arith.addi %105, %c0_i32_80 : i32
      %107 = arith.index_cast %106 : i32 to index
      %108 = memref.load %arg1[%107] : memref<16xi32, #tpu.memory_space<smem>>
      %c0_i32_81 = arith.constant 0 : i32
      %c0_i32_82 = arith.constant 0 : i32
      %109 = tpu.memref_slice %arg2[%108, %c0_i32_82] : memref<32x128xf32, #tpu.memory_space<any>> -> memref<1x128xf32, #tpu.memory_space<any>>
      %c0_i32_83 = arith.constant 0 : i32
      %c0_i32_84 = arith.constant 0 : i32
      %110 = tpu.memref_slice %arg4[%104, %c0_i32_83, %c0_i32_84] : memref<2x16x128xf32, #tpu.memory_space<vmem>> -> memref<1x1x128xf32, #tpu.memory_space<vmem>>
      %111 = tpu.memref_squeeze %110 : memref<1x1x128xf32, #tpu.memory_space<vmem>> -> memref<1x128xf32, #tpu.memory_space<vmem>>
      %112 = tpu.memref_slice %arg5[%104, %c0_i32_81] : memref<2x16x!tpu.dma_semaphore, #tpu.memory_space<semaphore_mem>> -> memref<1x1x!tpu.dma_semaphore, #tpu.memory_space<semaphore_mem>>
      %113 = tpu.memref_squeeze %112 : memref<1x1x!tpu.dma_semaphore, #tpu.memory_space<semaphore_mem>> -> memref<!tpu.dma_semaphore, #tpu.memory_space<semaphore_mem>>
      tpu.enqueue_dma source(%109 : memref<1x128xf32, #tpu.memory_space<any>>) target(%111 : memref<1x128xf32, #tpu.memory_space<vmem>>) target_semaphore(%113 : memref<!tpu.dma_semaphore, #tpu.memory_space<semaphore_mem>>)
      %c1_i32_85 = arith.constant 1 : i32
      %114 = arith.addi %105, %c1_i32_85 : i32
      %115 = arith.index_cast %114 : i32 to index
      %116 = memref.load %arg1[%115] : memref<16xi32, #tpu.memory_space<smem>>
      %c1_i32_86 = arith.constant 1 : i32
      %c0_i32_87 = arith.constant 0 : i32
      %117 = tpu.memref_slice %arg2[%116, %c0_i32_87] : memref<32x128xf32, #tpu.memory_space<any>> -> memref<1x128xf32, #tpu.memory_space<any>>
      %c1_i32_88 = arith.constant 1 : i32
      %c0_i32_89 = arith.constant 0 : i32
      %118 = tpu.memref_slice %arg4[%104, %c1_i32_88, %c0_i32_89] : memref<2x16x128xf32, #tpu.memory_space<vmem>> -> memref<1x1x128xf32, #tpu.memory_space<vmem>>
      %119 = tpu.memref_squeeze %118 : memref<1x1x128xf32, #tpu.memory_space<vmem>> -> memref<1x128xf32, #tpu.memory_space<vmem>>
      %120 = tpu.memref_slice %arg5[%104, %c1_i32_86] : memref<2x16x!tpu.dma_semaphore, #tpu.memory_space<semaphore_mem>> -> memref<1x1x!tpu.dma_semaphore, #tpu.memory_space<semaphore_mem>>
      %121 = tpu.memref_squeeze %120 : memref<1x1x!tpu.dma_semaphore, #tpu.memory_space<semaphore_mem>> -> memref<!tpu.dma_semaphore, #tpu.memory_space<semaphore_mem>>
      tpu.enqueue_dma source(%117 : memref<1x128xf32, #tpu.memory_space<any>>) target(%119 : memref<1x128xf32, #tpu.memory_space<vmem>>) target_semaphore(%121 : memref<!tpu.dma_semaphore, #tpu.memory_space<semaphore_mem>>)
      %c2_i32_90 = arith.constant 2 : i32
      %122 = arith.addi %105, %c2_i32_90 : i32
      %123 = arith.index_cast %122 : i32 to index
      %124 = memref.load %arg1[%123] : memref<16xi32, #tpu.memory_space<smem>>
      %c2_i32_91 = arith.constant 2 : i32
      %c0_i32_92 = arith.constant 0 : i32
      %125 = tpu.memref_slice %arg2[%124, %c0_i32_92] : memref<32x128xf32, #tpu.memory_space<any>> -> memref<1x128xf32, #tpu.memory_space<any>>
      %c2_i32_93 = arith.constant 2 : i32
      %c0_i32_94 = arith.constant 0 : i32
      %126 = tpu.memref_slice %arg4[%104, %c2_i32_93, %c0_i32_94] : memref<2x16x128xf32, #tpu.memory_space<vmem>> -> memref<1x1x128xf32, #tpu.memory_space<vmem>>
      %127 = tpu.memref_squeeze %126 : memref<1x1x128xf32, #tpu.memory_space<vmem>> -> memref<1x128xf32, #tpu.memory_space<vmem>>
      %128 = tpu.memref_slice %arg5[%104, %c2_i32_91] : memref<2x16x!tpu.dma_semaphore, #tpu.memory_space<semaphore_mem>> -> memref<1x1x!tpu.dma_semaphore, #tpu.memory_space<semaphore_mem>>
      %129 = tpu.memref_squeeze %128 : memref<1x1x!tpu.dma_semaphore, #tpu.memory_space<semaphore_mem>> -> memref<!tpu.dma_semaphore, #tpu.memory_space<semaphore_mem>>
      tpu.enqueue_dma source(%125 : memref<1x128xf32, #tpu.memory_space<any>>) target(%127 : memref<1x128xf32, #tpu.memory_space<vmem>>) target_semaphore(%129 : memref<!tpu.dma_semaphore, #tpu.memory_space<semaphore_mem>>)
      %c3_i32_95 = arith.constant 3 : i32
      %130 = arith.addi %105, %c3_i32_95 : i32
      %131 = arith.index_cast %130 : i32 to index
      %132 = memref.load %arg1[%131] : memref<16xi32, #tpu.memory_space<smem>>
      %c3_i32_96 = arith.constant 3 : i32
      %c0_i32_97 = arith.constant 0 : i32
      %133 = tpu.memref_slice %arg2[%132, %c0_i32_97] : memref<32x128xf32, #tpu.memory_space<any>> -> memref<1x128xf32, #tpu.memory_space<any>>
      %c3_i32_98 = arith.constant 3 : i32
      %c0_i32_99 = arith.constant 0 : i32
      %134 = tpu.memref_slice %arg4[%104, %c3_i32_98, %c0_i32_99] : memref<2x16x128xf32, #tpu.memory_space<vmem>> -> memref<1x1x128xf32, #tpu.memory_space<vmem>>
      %135 = tpu.memref_squeeze %134 : memref<1x1x128xf32, #tpu.memory_space<vmem>> -> memref<1x128xf32, #tpu.memory_space<vmem>>
      %136 = tpu.memref_slice %arg5[%104, %c3_i32_96] : memref<2x16x!tpu.dma_semaphore, #tpu.memory_space<semaphore_mem>> -> memref<1x1x!tpu.dma_semaphore, #tpu.memory_space<semaphore_mem>>
      %137 = tpu.memref_squeeze %136 : memref<1x1x!tpu.dma_semaphore, #tpu.memory_space<semaphore_mem>> -> memref<!tpu.dma_semaphore, #tpu.memory_space<semaphore_mem>>
      tpu.enqueue_dma source(%133 : memref<1x128xf32, #tpu.memory_space<any>>) target(%135 : memref<1x128xf32, #tpu.memory_space<vmem>>) target_semaphore(%137 : memref<!tpu.dma_semaphore, #tpu.memory_space<semaphore_mem>>)
      %c4_i32_100 = arith.constant 4 : i32
      %138 = arith.addi %105, %c4_i32_100 : i32
      %139 = arith.index_cast %138 : i32 to index
      %140 = memref.load %arg1[%139] : memref<16xi32, #tpu.memory_space<smem>>
      %c4_i32_101 = arith.constant 4 : i32
      %c0_i32_102 = arith.constant 0 : i32
      %141 = tpu.memref_slice %arg2[%140, %c0_i32_102] : memref<32x128xf32, #tpu.memory_space<any>> -> memref<1x128xf32, #tpu.memory_space<any>>
      %c4_i32_103 = arith.constant 4 : i32
      %c0_i32_104 = arith.constant 0 : i32
      %142 = tpu.memref_slice %arg4[%104, %c4_i32_103, %c0_i32_104] : memref<2x16x128xf32, #tpu.memory_space<vmem>> -> memref<1x1x128xf32, #tpu.memory_space<vmem>>
      %143 = tpu.memref_squeeze %142 : memref<1x1x128xf32, #tpu.memory_space<vmem>> -> memref<1x128xf32, #tpu.memory_space<vmem>>
      %144 = tpu.memref_slice %arg5[%104, %c4_i32_101] : memref<2x16x!tpu.dma_semaphore, #tpu.memory_space<semaphore_mem>> -> memref<1x1x!tpu.dma_semaphore, #tpu.memory_space<semaphore_mem>>
      %145 = tpu.memref_squeeze %144 : memref<1x1x!tpu.dma_semaphore, #tpu.memory_space<semaphore_mem>> -> memref<!tpu.dma_semaphore, #tpu.memory_space<semaphore_mem>>
      tpu.enqueue_dma source(%141 : memref<1x128xf32, #tpu.memory_space<any>>) target(%143 : memref<1x128xf32, #tpu.memory_space<vmem>>) target_semaphore(%145 : memref<!tpu.dma_semaphore, #tpu.memory_space<semaphore_mem>>)
      %c5_i32_105 = arith.constant 5 : i32
      %146 = arith.addi %105, %c5_i32_105 : i32
      %147 = arith.index_cast %146 : i32 to index
      %148 = memref.load %arg1[%147] : memref<16xi32, #tpu.memory_space<smem>>
      %c5_i32_106 = arith.constant 5 : i32
      %c0_i32_107 = arith.constant 0 : i32
      %149 = tpu.memref_slice %arg2[%148, %c0_i32_107] : memref<32x128xf32, #tpu.memory_space<any>> -> memref<1x128xf32, #tpu.memory_space<any>>
      %c5_i32_108 = arith.constant 5 : i32
      %c0_i32_109 = arith.constant 0 : i32
      %150 = tpu.memref_slice %arg4[%104, %c5_i32_108, %c0_i32_109] : memref<2x16x128xf32, #tpu.memory_space<vmem>> -> memref<1x1x128xf32, #tpu.memory_space<vmem>>
      %151 = tpu.memref_squeeze %150 : memref<1x1x128xf32, #tpu.memory_space<vmem>> -> memref<1x128xf32, #tpu.memory_space<vmem>>
      %152 = tpu.memref_slice %arg5[%104, %c5_i32_106] : memref<2x16x!tpu.dma_semaphore, #tpu.memory_space<semaphore_mem>> -> memref<1x1x!tpu.dma_semaphore, #tpu.memory_space<semaphore_mem>>
      %153 = tpu.memref_squeeze %152 : memref<1x1x!tpu.dma_semaphore, #tpu.memory_space<semaphore_mem>> -> memref<!tpu.dma_semaphore, #tpu.memory_space<semaphore_mem>>
      tpu.enqueue_dma source(%149 : memref<1x128xf32, #tpu.memory_space<any>>) target(%151 : memref<1x128xf32, #tpu.memory_space<vmem>>) target_semaphore(%153 : memref<!tpu.dma_semaphore, #tpu.memory_space<semaphore_mem>>)
      %c6_i32_110 = arith.constant 6 : i32
      %154 = arith.addi %105, %c6_i32_110 : i32
      %155 = arith.index_cast %154 : i32 to index
      %156 = memref.load %arg1[%155] : memref<16xi32, #tpu.memory_space<smem>>
      %c6_i32_111 = arith.constant 6 : i32
      %c0_i32_112 = arith.constant 0 : i32
      %157 = tpu.memref_slice %arg2[%156, %c0_i32_112] : memref<32x128xf32, #tpu.memory_space<any>> -> memref<1x128xf32, #tpu.memory_space<any>>
      %c6_i32_113 = arith.constant 6 : i32
      %c0_i32_114 = arith.constant 0 : i32
      %158 = tpu.memref_slice %arg4[%104, %c6_i32_113, %c0_i32_114] : memref<2x16x128xf32, #tpu.memory_space<vmem>> -> memref<1x1x128xf32, #tpu.memory_space<vmem>>
      %159 = tpu.memref_squeeze %158 : memref<1x1x128xf32, #tpu.memory_space<vmem>> -> memref<1x128xf32, #tpu.memory_space<vmem>>
      %160 = tpu.memref_slice %arg5[%104, %c6_i32_111] : memref<2x16x!tpu.dma_semaphore, #tpu.memory_space<semaphore_mem>> -> memref<1x1x!tpu.dma_semaphore, #tpu.memory_space<semaphore_mem>>
      %161 = tpu.memref_squeeze %160 : memref<1x1x!tpu.dma_semaphore, #tpu.memory_space<semaphore_mem>> -> memref<!tpu.dma_semaphore, #tpu.memory_space<semaphore_mem>>
      tpu.enqueue_dma source(%157 : memref<1x128xf32, #tpu.memory_space<any>>) target(%159 : memref<1x128xf32, #tpu.memory_space<vmem>>) target_semaphore(%161 : memref<!tpu.dma_semaphore, #tpu.memory_space<semaphore_mem>>)
      %c7_i32_115 = arith.constant 7 : i32
      %162 = arith.addi %105, %c7_i32_115 : i32
      %163 = arith.index_cast %162 : i32 to index
      %164 = memref.load %arg1[%163] : memref<16xi32, #tpu.memory_space<smem>>
      %c7_i32_116 = arith.constant 7 : i32
      %c0_i32_117 = arith.constant 0 : i32
      %165 = tpu.memref_slice %arg2[%164, %c0_i32_117] : memref<32x128xf32, #tpu.memory_space<any>> -> memref<1x128xf32, #tpu.memory_space<any>>
      %c7_i32_118 = arith.constant 7 : i32
      %c0_i32_119 = arith.constant 0 : i32
      %166 = tpu.memref_slice %arg4[%104, %c7_i32_118, %c0_i32_119] : memref<2x16x128xf32, #tpu.memory_space<vmem>> -> memref<1x1x128xf32, #tpu.memory_space<vmem>>
      %167 = tpu.memref_squeeze %166 : memref<1x1x128xf32, #tpu.memory_space<vmem>> -> memref<1x128xf32, #tpu.memory_space<vmem>>
      %168 = tpu.memref_slice %arg5[%104, %c7_i32_116] : memref<2x16x!tpu.dma_semaphore, #tpu.memory_space<semaphore_mem>> -> memref<1x1x!tpu.dma_semaphore, #tpu.memory_space<semaphore_mem>>
      %169 = tpu.memref_squeeze %168 : memref<1x1x!tpu.dma_semaphore, #tpu.memory_space<semaphore_mem>> -> memref<!tpu.dma_semaphore, #tpu.memory_space<semaphore_mem>>
      tpu.enqueue_dma source(%165 : memref<1x128xf32, #tpu.memory_space<any>>) target(%167 : memref<1x128xf32, #tpu.memory_space<vmem>>) target_semaphore(%169 : memref<!tpu.dma_semaphore, #tpu.memory_space<semaphore_mem>>)
      %c8_i32_120 = arith.constant 8 : i32
      %170 = arith.addi %105, %c8_i32_120 : i32
      %171 = arith.index_cast %170 : i32 to index
      %172 = memref.load %arg1[%171] : memref<16xi32, #tpu.memory_space<smem>>
      %c8_i32_121 = arith.constant 8 : i32
      %c0_i32_122 = arith.constant 0 : i32
      %173 = tpu.memref_slice %arg2[%172, %c0_i32_122] : memref<32x128xf32, #tpu.memory_space<any>> -> memref<1x128xf32, #tpu.memory_space<any>>
      %c8_i32_123 = arith.constant 8 : i32
      %c0_i32_124 = arith.constant 0 : i32
      %174 = tpu.memref_slice %arg4[%104, %c8_i32_123, %c0_i32_124] : memref<2x16x128xf32, #tpu.memory_space<vmem>> -> memref<1x1x128xf32, #tpu.memory_space<vmem>>
      %175 = tpu.memref_squeeze %174 : memref<1x1x128xf32, #tpu.memory_space<vmem>> -> memref<1x128xf32, #tpu.memory_space<vmem>>
      %176 = tpu.memref_slice %arg5[%104, %c8_i32_121] : memref<2x16x!tpu.dma_semaphore, #tpu.memory_space<semaphore_mem>> -> memref<1x1x!tpu.dma_semaphore, #tpu.memory_space<semaphore_mem>>
      %177 = tpu.memref_squeeze %176 : memref<1x1x!tpu.dma_semaphore, #tpu.memory_space<semaphore_mem>> -> memref<!tpu.dma_semaphore, #tpu.memory_space<semaphore_mem>>
      tpu.enqueue_dma source(%173 : memref<1x128xf32, #tpu.memory_space<any>>) target(%175 : memref<1x128xf32, #tpu.memory_space<vmem>>) target_semaphore(%177 : memref<!tpu.dma_semaphore, #tpu.memory_space<semaphore_mem>>)
      %c9_i32_125 = arith.constant 9 : i32
      %178 = arith.addi %105, %c9_i32_125 : i32
      %179 = arith.index_cast %178 : i32 to index
      %180 = memref.load %arg1[%179] : memref<16xi32, #tpu.memory_space<smem>>
      %c9_i32_126 = arith.constant 9 : i32
      %c0_i32_127 = arith.constant 0 : i32
      %181 = tpu.memref_slice %arg2[%180, %c0_i32_127] : memref<32x128xf32, #tpu.memory_space<any>> -> memref<1x128xf32, #tpu.memory_space<any>>
      %c9_i32_128 = arith.constant 9 : i32
      %c0_i32_129 = arith.constant 0 : i32
      %182 = tpu.memref_slice %arg4[%104, %c9_i32_128, %c0_i32_129] : memref<2x16x128xf32, #tpu.memory_space<vmem>> -> memref<1x1x128xf32, #tpu.memory_space<vmem>>
      %183 = tpu.memref_squeeze %182 : memref<1x1x128xf32, #tpu.memory_space<vmem>> -> memref<1x128xf32, #tpu.memory_space<vmem>>
      %184 = tpu.memref_slice %arg5[%104, %c9_i32_126] : memref<2x16x!tpu.dma_semaphore, #tpu.memory_space<semaphore_mem>> -> memref<1x1x!tpu.dma_semaphore, #tpu.memory_space<semaphore_mem>>
      %185 = tpu.memref_squeeze %184 : memref<1x1x!tpu.dma_semaphore, #tpu.memory_space<semaphore_mem>> -> memref<!tpu.dma_semaphore, #tpu.memory_space<semaphore_mem>>
      tpu.enqueue_dma source(%181 : memref<1x128xf32, #tpu.memory_space<any>>) target(%183 : memref<1x128xf32, #tpu.memory_space<vmem>>) target_semaphore(%185 : memref<!tpu.dma_semaphore, #tpu.memory_space<semaphore_mem>>)
      %c10_i32_130 = arith.constant 10 : i32
      %186 = arith.addi %105, %c10_i32_130 : i32
      %187 = arith.index_cast %186 : i32 to index
      %188 = memref.load %arg1[%187] : memref<16xi32, #tpu.memory_space<smem>>
      %c10_i32_131 = arith.constant 10 : i32
      %c0_i32_132 = arith.constant 0 : i32
      %189 = tpu.memref_slice %arg2[%188, %c0_i32_132] : memref<32x128xf32, #tpu.memory_space<any>> -> memref<1x128xf32, #tpu.memory_space<any>>
      %c10_i32_133 = arith.constant 10 : i32
      %c0_i32_134 = arith.constant 0 : i32
      %190 = tpu.memref_slice %arg4[%104, %c10_i32_133, %c0_i32_134] : memref<2x16x128xf32, #tpu.memory_space<vmem>> -> memref<1x1x128xf32, #tpu.memory_space<vmem>>
      %191 = tpu.memref_squeeze %190 : memref<1x1x128xf32, #tpu.memory_space<vmem>> -> memref<1x128xf32, #tpu.memory_space<vmem>>
      %192 = tpu.memref_slice %arg5[%104, %c10_i32_131] : memref<2x16x!tpu.dma_semaphore, #tpu.memory_space<semaphore_mem>> -> memref<1x1x!tpu.dma_semaphore, #tpu.memory_space<semaphore_mem>>
      %193 = tpu.memref_squeeze %192 : memref<1x1x!tpu.dma_semaphore, #tpu.memory_space<semaphore_mem>> -> memref<!tpu.dma_semaphore, #tpu.memory_space<semaphore_mem>>
      tpu.enqueue_dma source(%189 : memref<1x128xf32, #tpu.memory_space<any>>) target(%191 : memref<1x128xf32, #tpu.memory_space<vmem>>) target_semaphore(%193 : memref<!tpu.dma_semaphore, #tpu.memory_space<semaphore_mem>>)
      %c11_i32_135 = arith.constant 11 : i32
      %194 = arith.addi %105, %c11_i32_135 : i32
      %195 = arith.index_cast %194 : i32 to index
      %196 = memref.load %arg1[%195] : memref<16xi32, #tpu.memory_space<smem>>
      %c11_i32_136 = arith.constant 11 : i32
      %c0_i32_137 = arith.constant 0 : i32
      %197 = tpu.memref_slice %arg2[%196, %c0_i32_137] : memref<32x128xf32, #tpu.memory_space<any>> -> memref<1x128xf32, #tpu.memory_space<any>>
      %c11_i32_138 = arith.constant 11 : i32
      %c0_i32_139 = arith.constant 0 : i32
      %198 = tpu.memref_slice %arg4[%104, %c11_i32_138, %c0_i32_139] : memref<2x16x128xf32, #tpu.memory_space<vmem>> -> memref<1x1x128xf32, #tpu.memory_space<vmem>>
      %199 = tpu.memref_squeeze %198 : memref<1x1x128xf32, #tpu.memory_space<vmem>> -> memref<1x128xf32, #tpu.memory_space<vmem>>
      %200 = tpu.memref_slice %arg5[%104, %c11_i32_136] : memref<2x16x!tpu.dma_semaphore, #tpu.memory_space<semaphore_mem>> -> memref<1x1x!tpu.dma_semaphore, #tpu.memory_space<semaphore_mem>>
      %201 = tpu.memref_squeeze %200 : memref<1x1x!tpu.dma_semaphore, #tpu.memory_space<semaphore_mem>> -> memref<!tpu.dma_semaphore, #tpu.memory_space<semaphore_mem>>
      tpu.enqueue_dma source(%197 : memref<1x128xf32, #tpu.memory_space<any>>) target(%199 : memref<1x128xf32, #tpu.memory_space<vmem>>) target_semaphore(%201 : memref<!tpu.dma_semaphore, #tpu.memory_space<semaphore_mem>>)
      %c12_i32_140 = arith.constant 12 : i32
      %202 = arith.addi %105, %c12_i32_140 : i32
      %203 = arith.index_cast %202 : i32 to index
      %204 = memref.load %arg1[%203] : memref<16xi32, #tpu.memory_space<smem>>
      %c12_i32_141 = arith.constant 12 : i32
      %c0_i32_142 = arith.constant 0 : i32
      %205 = tpu.memref_slice %arg2[%204, %c0_i32_142] : memref<32x128xf32, #tpu.memory_space<any>> -> memref<1x128xf32, #tpu.memory_space<any>>
      %c12_i32_143 = arith.constant 12 : i32
      %c0_i32_144 = arith.constant 0 : i32
      %206 = tpu.memref_slice %arg4[%104, %c12_i32_143, %c0_i32_144] : memref<2x16x128xf32, #tpu.memory_space<vmem>> -> memref<1x1x128xf32, #tpu.memory_space<vmem>>
      %207 = tpu.memref_squeeze %206 : memref<1x1x128xf32, #tpu.memory_space<vmem>> -> memref<1x128xf32, #tpu.memory_space<vmem>>
      %208 = tpu.memref_slice %arg5[%104, %c12_i32_141] : memref<2x16x!tpu.dma_semaphore, #tpu.memory_space<semaphore_mem>> -> memref<1x1x!tpu.dma_semaphore, #tpu.memory_space<semaphore_mem>>
      %209 = tpu.memref_squeeze %208 : memref<1x1x!tpu.dma_semaphore, #tpu.memory_space<semaphore_mem>> -> memref<!tpu.dma_semaphore, #tpu.memory_space<semaphore_mem>>
      tpu.enqueue_dma source(%205 : memref<1x128xf32, #tpu.memory_space<any>>) target(%207 : memref<1x128xf32, #tpu.memory_space<vmem>>) target_semaphore(%209 : memref<!tpu.dma_semaphore, #tpu.memory_space<semaphore_mem>>)
      %c13_i32_145 = arith.constant 13 : i32
      %210 = arith.addi %105, %c13_i32_145 : i32
      %211 = arith.index_cast %210 : i32 to index
      %212 = memref.load %arg1[%211] : memref<16xi32, #tpu.memory_space<smem>>
      %c13_i32_146 = arith.constant 13 : i32
      %c0_i32_147 = arith.constant 0 : i32
      %213 = tpu.memref_slice %arg2[%212, %c0_i32_147] : memref<32x128xf32, #tpu.memory_space<any>> -> memref<1x128xf32, #tpu.memory_space<any>>
      %c13_i32_148 = arith.constant 13 : i32
      %c0_i32_149 = arith.constant 0 : i32
      %214 = tpu.memref_slice %arg4[%104, %c13_i32_148, %c0_i32_149] : memref<2x16x128xf32, #tpu.memory_space<vmem>> -> memref<1x1x128xf32, #tpu.memory_space<vmem>>
      %215 = tpu.memref_squeeze %214 : memref<1x1x128xf32, #tpu.memory_space<vmem>> -> memref<1x128xf32, #tpu.memory_space<vmem>>
      %216 = tpu.memref_slice %arg5[%104, %c13_i32_146] : memref<2x16x!tpu.dma_semaphore, #tpu.memory_space<semaphore_mem>> -> memref<1x1x!tpu.dma_semaphore, #tpu.memory_space<semaphore_mem>>
      %217 = tpu.memref_squeeze %216 : memref<1x1x!tpu.dma_semaphore, #tpu.memory_space<semaphore_mem>> -> memref<!tpu.dma_semaphore, #tpu.memory_space<semaphore_mem>>
      tpu.enqueue_dma source(%213 : memref<1x128xf32, #tpu.memory_space<any>>) target(%215 : memref<1x128xf32, #tpu.memory_space<vmem>>) target_semaphore(%217 : memref<!tpu.dma_semaphore, #tpu.memory_space<semaphore_mem>>)
      %c14_i32_150 = arith.constant 14 : i32
      %218 = arith.addi %105, %c14_i32_150 : i32
      %219 = arith.index_cast %218 : i32 to index
      %220 = memref.load %arg1[%219] : memref<16xi32, #tpu.memory_space<smem>>
      %c14_i32_151 = arith.constant 14 : i32
      %c0_i32_152 = arith.constant 0 : i32
      %221 = tpu.memref_slice %arg2[%220, %c0_i32_152] : memref<32x128xf32, #tpu.memory_space<any>> -> memref<1x128xf32, #tpu.memory_space<any>>
      %c14_i32_153 = arith.constant 14 : i32
      %c0_i32_154 = arith.constant 0 : i32
      %222 = tpu.memref_slice %arg4[%104, %c14_i32_153, %c0_i32_154] : memref<2x16x128xf32, #tpu.memory_space<vmem>> -> memref<1x1x128xf32, #tpu.memory_space<vmem>>
      %223 = tpu.memref_squeeze %222 : memref<1x1x128xf32, #tpu.memory_space<vmem>> -> memref<1x128xf32, #tpu.memory_space<vmem>>
      %224 = tpu.memref_slice %arg5[%104, %c14_i32_151] : memref<2x16x!tpu.dma_semaphore, #tpu.memory_space<semaphore_mem>> -> memref<1x1x!tpu.dma_semaphore, #tpu.memory_space<semaphore_mem>>
      %225 = tpu.memref_squeeze %224 : memref<1x1x!tpu.dma_semaphore, #tpu.memory_space<semaphore_mem>> -> memref<!tpu.dma_semaphore, #tpu.memory_space<semaphore_mem>>
      tpu.enqueue_dma source(%221 : memref<1x128xf32, #tpu.memory_space<any>>) target(%223 : memref<1x128xf32, #tpu.memory_space<vmem>>) target_semaphore(%225 : memref<!tpu.dma_semaphore, #tpu.memory_space<semaphore_mem>>)
      %c15_i32_155 = arith.constant 15 : i32
      %226 = arith.addi %105, %c15_i32_155 : i32
      %227 = arith.index_cast %226 : i32 to index
      %228 = memref.load %arg1[%227] : memref<16xi32, #tpu.memory_space<smem>>
      %c15_i32_156 = arith.constant 15 : i32
      %c0_i32_157 = arith.constant 0 : i32
      %229 = tpu.memref_slice %arg2[%228, %c0_i32_157] : memref<32x128xf32, #tpu.memory_space<any>> -> memref<1x128xf32, #tpu.memory_space<any>>
      %c15_i32_158 = arith.constant 15 : i32
      %c0_i32_159 = arith.constant 0 : i32
      %230 = tpu.memref_slice %arg4[%104, %c15_i32_158, %c0_i32_159] : memref<2x16x128xf32, #tpu.memory_space<vmem>> -> memref<1x1x128xf32, #tpu.memory_space<vmem>>
      %231 = tpu.memref_squeeze %230 : memref<1x1x128xf32, #tpu.memory_space<vmem>> -> memref<1x128xf32, #tpu.memory_space<vmem>>
      %232 = tpu.memref_slice %arg5[%104, %c15_i32_156] : memref<2x16x!tpu.dma_semaphore, #tpu.memory_space<semaphore_mem>> -> memref<1x1x!tpu.dma_semaphore, #tpu.memory_space<semaphore_mem>>
      %233 = tpu.memref_squeeze %232 : memref<1x1x!tpu.dma_semaphore, #tpu.memory_space<semaphore_mem>> -> memref<!tpu.dma_semaphore, #tpu.memory_space<semaphore_mem>>
      tpu.enqueue_dma source(%229 : memref<1x128xf32, #tpu.memory_space<any>>) target(%231 : memref<1x128xf32, #tpu.memory_space<vmem>>) target_semaphore(%233 : memref<!tpu.dma_semaphore, #tpu.memory_space<semaphore_mem>>)
    } else {
    }
    %c0_i32_8 = arith.constant 0 : i32
    %c0_i32_9 = arith.constant 0 : i32
    %c0_i32_10 = arith.constant 0 : i32
    %17 = tpu.memref_slice %arg2[%c0_i32_9, %c0_i32_10] : memref<32x128xf32, #tpu.memory_space<any>> -> memref<1x128xf32, #tpu.memory_space<any>>
    %c0_i32_11 = arith.constant 0 : i32
    %c0_i32_12 = arith.constant 0 : i32
    %18 = tpu.memref_slice %arg4[%9, %c0_i32_11, %c0_i32_12] : memref<2x16x128xf32, #tpu.memory_space<vmem>> -> memref<1x1x128xf32, #tpu.memory_space<vmem>>
    %19 = tpu.memref_squeeze %18 : memref<1x1x128xf32, #tpu.memory_space<vmem>> -> memref<1x128xf32, #tpu.memory_space<vmem>>
    %20 = tpu.memref_slice %arg5[%9, %c0_i32_8] : memref<2x16x!tpu.dma_semaphore, #tpu.memory_space<semaphore_mem>> -> memref<1x1x!tpu.dma_semaphore, #tpu.memory_space<semaphore_mem>>
    %21 = tpu.memref_squeeze %20 : memref<1x1x!tpu.dma_semaphore, #tpu.memory_space<semaphore_mem>> -> memref<!tpu.dma_semaphore, #tpu.memory_space<semaphore_mem>>
    tpu.wait_dma2 semaphore(%21 : memref<!tpu.dma_semaphore, #tpu.memory_space<semaphore_mem>>) src(%17 : memref<1x128xf32, #tpu.memory_space<any>>) dst(%19 : memref<1x128xf32, #tpu.memory_space<vmem>>)
    %c1_i32_13 = arith.constant 1 : i32
    %c0_i32_14 = arith.constant 0 : i32
    %c0_i32_15 = arith.constant 0 : i32
    %22 = tpu.memref_slice %arg2[%c0_i32_14, %c0_i32_15] : memref<32x128xf32, #tpu.memory_space<any>> -> memref<1x128xf32, #tpu.memory_space<any>>
    %c1_i32_16 = arith.constant 1 : i32
    %c0_i32_17 = arith.constant 0 : i32
    %23 = tpu.memref_slice %arg4[%9, %c1_i32_16, %c0_i32_17] : memref<2x16x128xf32, #tpu.memory_space<vmem>> -> memref<1x1x128xf32, #tpu.memory_space<vmem>>
    %24 = tpu.memref_squeeze %23 : memref<1x1x128xf32, #tpu.memory_space<vmem>> -> memref<1x128xf32, #tpu.memory_space<vmem>>
    %25 = tpu.memref_slice %arg5[%9, %c1_i32_13] : memref<2x16x!tpu.dma_semaphore, #tpu.memory_space<semaphore_mem>> -> memref<1x1x!tpu.dma_semaphore, #tpu.memory_space<semaphore_mem>>
    %26 = tpu.memref_squeeze %25 : memref<1x1x!tpu.dma_semaphore, #tpu.memory_space<semaphore_mem>> -> memref<!tpu.dma_semaphore, #tpu.memory_space<semaphore_mem>>
    tpu.wait_dma2 semaphore(%26 : memref<!tpu.dma_semaphore, #tpu.memory_space<semaphore_mem>>) src(%22 : memref<1x128xf32, #tpu.memory_space<any>>) dst(%24 : memref<1x128xf32, #tpu.memory_space<vmem>>)
    %c2_i32_18 = arith.constant 2 : i32
    %c0_i32_19 = arith.constant 0 : i32
    %c0_i32_20 = arith.constant 0 : i32
    %27 = tpu.memref_slice %arg2[%c0_i32_19, %c0_i32_20] : memref<32x128xf32, #tpu.memory_space<any>> -> memref<1x128xf32, #tpu.memory_space<any>>
    %c2_i32_21 = arith.constant 2 : i32
    %c0_i32_22 = arith.constant 0 : i32
    %28 = tpu.memref_slice %arg4[%9, %c2_i32_21, %c0_i32_22] : memref<2x16x128xf32, #tpu.memory_space<vmem>> -> memref<1x1x128xf32, #tpu.memory_space<vmem>>
    %29 = tpu.memref_squeeze %28 : memref<1x1x128xf32, #tpu.memory_space<vmem>> -> memref<1x128xf32, #tpu.memory_space<vmem>>
    %30 = tpu.memref_slice %arg5[%9, %c2_i32_18] : memref<2x16x!tpu.dma_semaphore, #tpu.memory_space<semaphore_mem>> -> memref<1x1x!tpu.dma_semaphore, #tpu.memory_space<semaphore_mem>>
    %31 = tpu.memref_squeeze %30 : memref<1x1x!tpu.dma_semaphore, #tpu.memory_space<semaphore_mem>> -> memref<!tpu.dma_semaphore, #tpu.memory_space<semaphore_mem>>
    tpu.wait_dma2 semaphore(%31 : memref<!tpu.dma_semaphore, #tpu.memory_space<semaphore_mem>>) src(%27 : memref<1x128xf32, #tpu.memory_space<any>>) dst(%29 : memref<1x128xf32, #tpu.memory_space<vmem>>)
    %c3_i32 = arith.constant 3 : i32
    %c0_i32_23 = arith.constant 0 : i32
    %c0_i32_24 = arith.constant 0 : i32
    %32 = tpu.memref_slice %arg2[%c0_i32_23, %c0_i32_24] : memref<32x128xf32, #tpu.memory_space<any>> -> memref<1x128xf32, #tpu.memory_space<any>>
    %c3_i32_25 = arith.constant 3 : i32
    %c0_i32_26 = arith.constant 0 : i32
    %33 = tpu.memref_slice %arg4[%9, %c3_i32_25, %c0_i32_26] : memref<2x16x128xf32, #tpu.memory_space<vmem>> -> memref<1x1x128xf32, #tpu.memory_space<vmem>>
    %34 = tpu.memref_squeeze %33 : memref<1x1x128xf32, #tpu.memory_space<vmem>> -> memref<1x128xf32, #tpu.memory_space<vmem>>
    %35 = tpu.memref_slice %arg5[%9, %c3_i32] : memref<2x16x!tpu.dma_semaphore, #tpu.memory_space<semaphore_mem>> -> memref<1x1x!tpu.dma_semaphore, #tpu.memory_space<semaphore_mem>>
    %36 = tpu.memref_squeeze %35 : memref<1x1x!tpu.dma_semaphore, #tpu.memory_space<semaphore_mem>> -> memref<!tpu.dma_semaphore, #tpu.memory_space<semaphore_mem>>
    tpu.wait_dma2 semaphore(%36 : memref<!tpu.dma_semaphore, #tpu.memory_space<semaphore_mem>>) src(%32 : memref<1x128xf32, #tpu.memory_space<any>>) dst(%34 : memref<1x128xf32, #tpu.memory_space<vmem>>)
    %c4_i32 = arith.constant 4 : i32
    %c0_i32_27 = arith.constant 0 : i32
    %c0_i32_28 = arith.constant 0 : i32
    %37 = tpu.memref_slice %arg2[%c0_i32_27, %c0_i32_28] : memref<32x128xf32, #tpu.memory_space<any>> -> memref<1x128xf32, #tpu.memory_space<any>>
    %c4_i32_29 = arith.constant 4 : i32
    %c0_i32_30 = arith.constant 0 : i32
    %38 = tpu.memref_slice %arg4[%9, %c4_i32_29, %c0_i32_30] : memref<2x16x128xf32, #tpu.memory_space<vmem>> -> memref<1x1x128xf32, #tpu.memory_space<vmem>>
    %39 = tpu.memref_squeeze %38 : memref<1x1x128xf32, #tpu.memory_space<vmem>> -> memref<1x128xf32, #tpu.memory_space<vmem>>
    %40 = tpu.memref_slice %arg5[%9, %c4_i32] : memref<2x16x!tpu.dma_semaphore, #tpu.memory_space<semaphore_mem>> -> memref<1x1x!tpu.dma_semaphore, #tpu.memory_space<semaphore_mem>>
    %41 = tpu.memref_squeeze %40 : memref<1x1x!tpu.dma_semaphore, #tpu.memory_space<semaphore_mem>> -> memref<!tpu.dma_semaphore, #tpu.memory_space<semaphore_mem>>
    tpu.wait_dma2 semaphore(%41 : memref<!tpu.dma_semaphore, #tpu.memory_space<semaphore_mem>>) src(%37 : memref<1x128xf32, #tpu.memory_space<any>>) dst(%39 : memref<1x128xf32, #tpu.memory_space<vmem>>)
    %c5_i32 = arith.constant 5 : i32
    %c0_i32_31 = arith.constant 0 : i32
    %c0_i32_32 = arith.constant 0 : i32
    %42 = tpu.memref_slice %arg2[%c0_i32_31, %c0_i32_32] : memref<32x128xf32, #tpu.memory_space<any>> -> memref<1x128xf32, #tpu.memory_space<any>>
    %c5_i32_33 = arith.constant 5 : i32
    %c0_i32_34 = arith.constant 0 : i32
    %43 = tpu.memref_slice %arg4[%9, %c5_i32_33, %c0_i32_34] : memref<2x16x128xf32, #tpu.memory_space<vmem>> -> memref<1x1x128xf32, #tpu.memory_space<vmem>>
    %44 = tpu.memref_squeeze %43 : memref<1x1x128xf32, #tpu.memory_space<vmem>> -> memref<1x128xf32, #tpu.memory_space<vmem>>
    %45 = tpu.memref_slice %arg5[%9, %c5_i32] : memref<2x16x!tpu.dma_semaphore, #tpu.memory_space<semaphore_mem>> -> memref<1x1x!tpu.dma_semaphore, #tpu.memory_space<semaphore_mem>>
    %46 = tpu.memref_squeeze %45 : memref<1x1x!tpu.dma_semaphore, #tpu.memory_space<semaphore_mem>> -> memref<!tpu.dma_semaphore, #tpu.memory_space<semaphore_mem>>
    tpu.wait_dma2 semaphore(%46 : memref<!tpu.dma_semaphore, #tpu.memory_space<semaphore_mem>>) src(%42 : memref<1x128xf32, #tpu.memory_space<any>>) dst(%44 : memref<1x128xf32, #tpu.memory_space<vmem>>)
    %c6_i32 = arith.constant 6 : i32
    %c0_i32_35 = arith.constant 0 : i32
    %c0_i32_36 = arith.constant 0 : i32
    %47 = tpu.memref_slice %arg2[%c0_i32_35, %c0_i32_36] : memref<32x128xf32, #tpu.memory_space<any>> -> memref<1x128xf32, #tpu.memory_space<any>>
    %c6_i32_37 = arith.constant 6 : i32
    %c0_i32_38 = arith.constant 0 : i32
    %48 = tpu.memref_slice %arg4[%9, %c6_i32_37, %c0_i32_38] : memref<2x16x128xf32, #tpu.memory_space<vmem>> -> memref<1x1x128xf32, #tpu.memory_space<vmem>>
    %49 = tpu.memref_squeeze %48 : memref<1x1x128xf32, #tpu.memory_space<vmem>> -> memref<1x128xf32, #tpu.memory_space<vmem>>
    %50 = tpu.memref_slice %arg5[%9, %c6_i32] : memref<2x16x!tpu.dma_semaphore, #tpu.memory_space<semaphore_mem>> -> memref<1x1x!tpu.dma_semaphore, #tpu.memory_space<semaphore_mem>>
    %51 = tpu.memref_squeeze %50 : memref<1x1x!tpu.dma_semaphore, #tpu.memory_space<semaphore_mem>> -> memref<!tpu.dma_semaphore, #tpu.memory_space<semaphore_mem>>
    tpu.wait_dma2 semaphore(%51 : memref<!tpu.dma_semaphore, #tpu.memory_space<semaphore_mem>>) src(%47 : memref<1x128xf32, #tpu.memory_space<any>>) dst(%49 : memref<1x128xf32, #tpu.memory_space<vmem>>)
    %c7_i32 = arith.constant 7 : i32
    %c0_i32_39 = arith.constant 0 : i32
    %c0_i32_40 = arith.constant 0 : i32
    %52 = tpu.memref_slice %arg2[%c0_i32_39, %c0_i32_40] : memref<32x128xf32, #tpu.memory_space<any>> -> memref<1x128xf32, #tpu.memory_space<any>>
    %c7_i32_41 = arith.constant 7 : i32
    %c0_i32_42 = arith.constant 0 : i32
    %53 = tpu.memref_slice %arg4[%9, %c7_i32_41, %c0_i32_42] : memref<2x16x128xf32, #tpu.memory_space<vmem>> -> memref<1x1x128xf32, #tpu.memory_space<vmem>>
    %54 = tpu.memref_squeeze %53 : memref<1x1x128xf32, #tpu.memory_space<vmem>> -> memref<1x128xf32, #tpu.memory_space<vmem>>
    %55 = tpu.memref_slice %arg5[%9, %c7_i32] : memref<2x16x!tpu.dma_semaphore, #tpu.memory_space<semaphore_mem>> -> memref<1x1x!tpu.dma_semaphore, #tpu.memory_space<semaphore_mem>>
    %56 = tpu.memref_squeeze %55 : memref<1x1x!tpu.dma_semaphore, #tpu.memory_space<semaphore_mem>> -> memref<!tpu.dma_semaphore, #tpu.memory_space<semaphore_mem>>
    tpu.wait_dma2 semaphore(%56 : memref<!tpu.dma_semaphore, #tpu.memory_space<semaphore_mem>>) src(%52 : memref<1x128xf32, #tpu.memory_space<any>>) dst(%54 : memref<1x128xf32, #tpu.memory_space<vmem>>)
    %c8_i32 = arith.constant 8 : i32
    %c0_i32_43 = arith.constant 0 : i32
    %c0_i32_44 = arith.constant 0 : i32
    %57 = tpu.memref_slice %arg2[%c0_i32_43, %c0_i32_44] : memref<32x128xf32, #tpu.memory_space<any>> -> memref<1x128xf32, #tpu.memory_space<any>>
    %c8_i32_45 = arith.constant 8 : i32
    %c0_i32_46 = arith.constant 0 : i32
    %58 = tpu.memref_slice %arg4[%9, %c8_i32_45, %c0_i32_46] : memref<2x16x128xf32, #tpu.memory_space<vmem>> -> memref<1x1x128xf32, #tpu.memory_space<vmem>>
    %59 = tpu.memref_squeeze %58 : memref<1x1x128xf32, #tpu.memory_space<vmem>> -> memref<1x128xf32, #tpu.memory_space<vmem>>
    %60 = tpu.memref_slice %arg5[%9, %c8_i32] : memref<2x16x!tpu.dma_semaphore, #tpu.memory_space<semaphore_mem>> -> memref<1x1x!tpu.dma_semaphore, #tpu.memory_space<semaphore_mem>>
    %61 = tpu.memref_squeeze %60 : memref<1x1x!tpu.dma_semaphore, #tpu.memory_space<semaphore_mem>> -> memref<!tpu.dma_semaphore, #tpu.memory_space<semaphore_mem>>
    tpu.wait_dma2 semaphore(%61 : memref<!tpu.dma_semaphore, #tpu.memory_space<semaphore_mem>>) src(%57 : memref<1x128xf32, #tpu.memory_space<any>>) dst(%59 : memref<1x128xf32, #tpu.memory_space<vmem>>)
    %c9_i32 = arith.constant 9 : i32
    %c0_i32_47 = arith.constant 0 : i32
    %c0_i32_48 = arith.constant 0 : i32
    %62 = tpu.memref_slice %arg2[%c0_i32_47, %c0_i32_48] : memref<32x128xf32, #tpu.memory_space<any>> -> memref<1x128xf32, #tpu.memory_space<any>>
    %c9_i32_49 = arith.constant 9 : i32
    %c0_i32_50 = arith.constant 0 : i32
    %63 = tpu.memref_slice %arg4[%9, %c9_i32_49, %c0_i32_50] : memref<2x16x128xf32, #tpu.memory_space<vmem>> -> memref<1x1x128xf32, #tpu.memory_space<vmem>>
    %64 = tpu.memref_squeeze %63 : memref<1x1x128xf32, #tpu.memory_space<vmem>> -> memref<1x128xf32, #tpu.memory_space<vmem>>
    %65 = tpu.memref_slice %arg5[%9, %c9_i32] : memref<2x16x!tpu.dma_semaphore, #tpu.memory_space<semaphore_mem>> -> memref<1x1x!tpu.dma_semaphore, #tpu.memory_space<semaphore_mem>>
    %66 = tpu.memref_squeeze %65 : memref<1x1x!tpu.dma_semaphore, #tpu.memory_space<semaphore_mem>> -> memref<!tpu.dma_semaphore, #tpu.memory_space<semaphore_mem>>
    tpu.wait_dma2 semaphore(%66 : memref<!tpu.dma_semaphore, #tpu.memory_space<semaphore_mem>>) src(%62 : memref<1x128xf32, #tpu.memory_space<any>>) dst(%64 : memref<1x128xf32, #tpu.memory_space<vmem>>)
    %c10_i32 = arith.constant 10 : i32
    %c0_i32_51 = arith.constant 0 : i32
    %c0_i32_52 = arith.constant 0 : i32
    %67 = tpu.memref_slice %arg2[%c0_i32_51, %c0_i32_52] : memref<32x128xf32, #tpu.memory_space<any>> -> memref<1x128xf32, #tpu.memory_space<any>>
    %c10_i32_53 = arith.constant 10 : i32
    %c0_i32_54 = arith.constant 0 : i32
    %68 = tpu.memref_slice %arg4[%9, %c10_i32_53, %c0_i32_54] : memref<2x16x128xf32, #tpu.memory_space<vmem>> -> memref<1x1x128xf32, #tpu.memory_space<vmem>>
    %69 = tpu.memref_squeeze %68 : memref<1x1x128xf32, #tpu.memory_space<vmem>> -> memref<1x128xf32, #tpu.memory_space<vmem>>
    %70 = tpu.memref_slice %arg5[%9, %c10_i32] : memref<2x16x!tpu.dma_semaphore, #tpu.memory_space<semaphore_mem>> -> memref<1x1x!tpu.dma_semaphore, #tpu.memory_space<semaphore_mem>>
    %71 = tpu.memref_squeeze %70 : memref<1x1x!tpu.dma_semaphore, #tpu.memory_space<semaphore_mem>> -> memref<!tpu.dma_semaphore, #tpu.memory_space<semaphore_mem>>
    tpu.wait_dma2 semaphore(%71 : memref<!tpu.dma_semaphore, #tpu.memory_space<semaphore_mem>>) src(%67 : memref<1x128xf32, #tpu.memory_space<any>>) dst(%69 : memref<1x128xf32, #tpu.memory_space<vmem>>)
    %c11_i32 = arith.constant 11 : i32
    %c0_i32_55 = arith.constant 0 : i32
    %c0_i32_56 = arith.constant 0 : i32
    %72 = tpu.memref_slice %arg2[%c0_i32_55, %c0_i32_56] : memref<32x128xf32, #tpu.memory_space<any>> -> memref<1x128xf32, #tpu.memory_space<any>>
    %c11_i32_57 = arith.constant 11 : i32
    %c0_i32_58 = arith.constant 0 : i32
    %73 = tpu.memref_slice %arg4[%9, %c11_i32_57, %c0_i32_58] : memref<2x16x128xf32, #tpu.memory_space<vmem>> -> memref<1x1x128xf32, #tpu.memory_space<vmem>>
    %74 = tpu.memref_squeeze %73 : memref<1x1x128xf32, #tpu.memory_space<vmem>> -> memref<1x128xf32, #tpu.memory_space<vmem>>
    %75 = tpu.memref_slice %arg5[%9, %c11_i32] : memref<2x16x!tpu.dma_semaphore, #tpu.memory_space<semaphore_mem>> -> memref<1x1x!tpu.dma_semaphore, #tpu.memory_space<semaphore_mem>>
    %76 = tpu.memref_squeeze %75 : memref<1x1x!tpu.dma_semaphore, #tpu.memory_space<semaphore_mem>> -> memref<!tpu.dma_semaphore, #tpu.memory_space<semaphore_mem>>
    tpu.wait_dma2 semaphore(%76 : memref<!tpu.dma_semaphore, #tpu.memory_space<semaphore_mem>>) src(%72 : memref<1x128xf32, #tpu.memory_space<any>>) dst(%74 : memref<1x128xf32, #tpu.memory_space<vmem>>)
    %c12_i32 = arith.constant 12 : i32
    %c0_i32_59 = arith.constant 0 : i32
    %c0_i32_60 = arith.constant 0 : i32
    %77 = tpu.memref_slice %arg2[%c0_i32_59, %c0_i32_60] : memref<32x128xf32, #tpu.memory_space<any>> -> memref<1x128xf32, #tpu.memory_space<any>>
    %c12_i32_61 = arith.constant 12 : i32
    %c0_i32_62 = arith.constant 0 : i32
    %78 = tpu.memref_slice %arg4[%9, %c12_i32_61, %c0_i32_62] : memref<2x16x128xf32, #tpu.memory_space<vmem>> -> memref<1x1x128xf32, #tpu.memory_space<vmem>>
    %79 = tpu.memref_squeeze %78 : memref<1x1x128xf32, #tpu.memory_space<vmem>> -> memref<1x128xf32, #tpu.memory_space<vmem>>
    %80 = tpu.memref_slice %arg5[%9, %c12_i32] : memref<2x16x!tpu.dma_semaphore, #tpu.memory_space<semaphore_mem>> -> memref<1x1x!tpu.dma_semaphore, #tpu.memory_space<semaphore_mem>>
    %81 = tpu.memref_squeeze %80 : memref<1x1x!tpu.dma_semaphore, #tpu.memory_space<semaphore_mem>> -> memref<!tpu.dma_semaphore, #tpu.memory_space<semaphore_mem>>
    tpu.wait_dma2 semaphore(%81 : memref<!tpu.dma_semaphore, #tpu.memory_space<semaphore_mem>>) src(%77 : memref<1x128xf32, #tpu.memory_space<any>>) dst(%79 : memref<1x128xf32, #tpu.memory_space<vmem>>)
    %c13_i32 = arith.constant 13 : i32
    %c0_i32_63 = arith.constant 0 : i32
    %c0_i32_64 = arith.constant 0 : i32
    %82 = tpu.memref_slice %arg2[%c0_i32_63, %c0_i32_64] : memref<32x128xf32, #tpu.memory_space<any>> -> memref<1x128xf32, #tpu.memory_space<any>>
    %c13_i32_65 = arith.constant 13 : i32
    %c0_i32_66 = arith.constant 0 : i32
    %83 = tpu.memref_slice %arg4[%9, %c13_i32_65, %c0_i32_66] : memref<2x16x128xf32, #tpu.memory_space<vmem>> -> memref<1x1x128xf32, #tpu.memory_space<vmem>>
    %84 = tpu.memref_squeeze %83 : memref<1x1x128xf32, #tpu.memory_space<vmem>> -> memref<1x128xf32, #tpu.memory_space<vmem>>
    %85 = tpu.memref_slice %arg5[%9, %c13_i32] : memref<2x16x!tpu.dma_semaphore, #tpu.memory_space<semaphore_mem>> -> memref<1x1x!tpu.dma_semaphore, #tpu.memory_space<semaphore_mem>>
    %86 = tpu.memref_squeeze %85 : memref<1x1x!tpu.dma_semaphore, #tpu.memory_space<semaphore_mem>> -> memref<!tpu.dma_semaphore, #tpu.memory_space<semaphore_mem>>
    tpu.wait_dma2 semaphore(%86 : memref<!tpu.dma_semaphore, #tpu.memory_space<semaphore_mem>>) src(%82 : memref<1x128xf32, #tpu.memory_space<any>>) dst(%84 : memref<1x128xf32, #tpu.memory_space<vmem>>)
    %c14_i32 = arith.constant 14 : i32
    %c0_i32_67 = arith.constant 0 : i32
    %c0_i32_68 = arith.constant 0 : i32
    %87 = tpu.memref_slice %arg2[%c0_i32_67, %c0_i32_68] : memref<32x128xf32, #tpu.memory_space<any>> -> memref<1x128xf32, #tpu.memory_space<any>>
    %c14_i32_69 = arith.constant 14 : i32
    %c0_i32_70 = arith.constant 0 : i32
    %88 = tpu.memref_slice %arg4[%9, %c14_i32_69, %c0_i32_70] : memref<2x16x128xf32, #tpu.memory_space<vmem>> -> memref<1x1x128xf32, #tpu.memory_space<vmem>>
    %89 = tpu.memref_squeeze %88 : memref<1x1x128xf32, #tpu.memory_space<vmem>> -> memref<1x128xf32, #tpu.memory_space<vmem>>
    %90 = tpu.memref_slice %arg5[%9, %c14_i32] : memref<2x16x!tpu.dma_semaphore, #tpu.memory_space<semaphore_mem>> -> memref<1x1x!tpu.dma_semaphore, #tpu.memory_space<semaphore_mem>>
    %91 = tpu.memref_squeeze %90 : memref<1x1x!tpu.dma_semaphore, #tpu.memory_space<semaphore_mem>> -> memref<!tpu.dma_semaphore, #tpu.memory_space<semaphore_mem>>
    tpu.wait_dma2 semaphore(%91 : memref<!tpu.dma_semaphore, #tpu.memory_space<semaphore_mem>>) src(%87 : memref<1x128xf32, #tpu.memory_space<any>>) dst(%89 : memref<1x128xf32, #tpu.memory_space<vmem>>)
    %c15_i32 = arith.constant 15 : i32
    %c0_i32_71 = arith.constant 0 : i32
    %c0_i32_72 = arith.constant 0 : i32
    %92 = tpu.memref_slice %arg2[%c0_i32_71, %c0_i32_72] : memref<32x128xf32, #tpu.memory_space<any>> -> memref<1x128xf32, #tpu.memory_space<any>>
    %c15_i32_73 = arith.constant 15 : i32
    %c0_i32_74 = arith.constant 0 : i32
    %93 = tpu.memref_slice %arg4[%9, %c15_i32_73, %c0_i32_74] : memref<2x16x128xf32, #tpu.memory_space<vmem>> -> memref<1x1x128xf32, #tpu.memory_space<vmem>>
    %94 = tpu.memref_squeeze %93 : memref<1x1x128xf32, #tpu.memory_space<vmem>> -> memref<1x128xf32, #tpu.memory_space<vmem>>
    %95 = tpu.memref_slice %arg5[%9, %c15_i32] : memref<2x16x!tpu.dma_semaphore, #tpu.memory_space<semaphore_mem>> -> memref<1x1x!tpu.dma_semaphore, #tpu.memory_space<semaphore_mem>>
    %96 = tpu.memref_squeeze %95 : memref<1x1x!tpu.dma_semaphore, #tpu.memory_space<semaphore_mem>> -> memref<!tpu.dma_semaphore, #tpu.memory_space<semaphore_mem>>
    tpu.wait_dma2 semaphore(%96 : memref<!tpu.dma_semaphore, #tpu.memory_space<semaphore_mem>>) src(%92 : memref<1x128xf32, #tpu.memory_space<any>>) dst(%94 : memref<1x128xf32, #tpu.memory_space<vmem>>)
    %97 = arith.index_cast %9 : i32 to index
    %c0 = arith.constant 0 : index
    %c0_75 = arith.constant 0 : index
    %98 = vector.load %arg4[%97, %c0, %c0_75] : memref<2x16x128xf32, #tpu.memory_space<vmem>>, vector<1x16x128xf32>
    %99 = vector.shape_cast %98 : vector<1x16x128xf32> to vector<16x128xf32>
    %cst = arith.constant 5.65685415 : f32
    %100 = vector.broadcast %cst : f32 to vector<16x128xf32>
    %101 = arith.mulf %99, %100 : vector<16x128xf32>
    %c0_76 = arith.constant 0 : index
    %c0_77 = arith.constant 0 : index
    %102 = vector.load %arg3[%c0_76, %c0_77] : memref<16x128xf32, #tpu.memory_space<vmem>>, vector<16x128xf32>
    tpu.vector_store %arg3[%c0_76, %c0_77], %101 {strides = array<i32>} : memref<16x128xf32, #tpu.memory_space<vmem>>, vector<16x128xf32>,
    return
  }
  func.func @transform_1(%arg0: i32, %arg1: memref<16xi32, #tpu.memory_space<smem>>) -> (i32, i32) {
    %c0_i32 = arith.constant 0 : i32
    %c0_i32_0 = arith.constant 0 : i32
    return %arg0, %c0_i32 : i32, i32
  }
}

</mosaic_0001>

<llo_original>
// kernel: tpu_custom_call.1
$region0: #{tpu_custom_call.1}
  #allocation0 [shape = 'u32[]', space=smem, size = 0x4, offset = 0x4, fixed_abs, tag = 'smem constant byte address 0x4 - core index']
  #allocation1 [shape = 'u32[144,128]{1,0:T(1,128)}', space=vmem, size = 0x12000, scoped, tag = 'internal scratch']
  #allocation2 [shape = 'f32[2,16,128]{2,1,0:T(8,128)}', space=vmem, size = 0x4000, scoped, tag = 'scratch operand']
  #allocation3 [shape = 's32[32]{0}', space=sflag, size = 0x80, scoped, tag = 'scratch operand']
  #allocation4 [shape = 's32[1]{0}', space=sflag, size = 0x4, scoped, tag = 'scoped memory for tpu_custom_call.1']
  #allocation5 [shape = 'u8[512]{0}', space=smem, size = 0x200, scoped, tag = 'prefetched SMEM operand 0']
  #allocation8 [shape = 's32[]', space=sflag, size = 0x4, offset = 0, fixed_abs, tag = 'sflag constant byte address 0x0 - dummy sync flag']
  #allocation9 [shape = 's32[]', space=sflag, size = 0x4, offset = 0, fixed_abs, tag = 'sflag constant byte address 0x0 - dummy sync flag']
  #allocation10 [shape = 'u32[]', space=smem, size = 0x4, offset = 0x44, fixed_abs, tag = 'smem constant byte address 0x44 - assertion arg 0']
  #allocation11 [shape = 'u32[]', space=smem, size = 0x4, offset = 0x48, fixed_abs, tag = 'smem constant byte address 0x48 - assertion arg 1']
  #allocation12 [shape = 's32[]', space=sflag, size = 0x4, offset = 0, fixed_abs, tag = 'sflag constant byte address 0x0 - dummy sync flag']
  #allocation13 [shape = 's32[]', space=sflag, size = 0x4, offset = 0, fixed_abs, tag = 'sflag constant byte address 0x0 - dummy sync flag']
  #allocation14 [shape = 's32[]', space=sflag, size = 0x4, offset = 0, fixed_abs, tag = 'sflag constant byte address 0x0 - dummy sync flag']
  #allocation15 [shape = 's32[]', space=sflag, size = 0x4, offset = 0, fixed_abs, tag = 'sflag constant byte address 0x0 - dummy sync flag']
  #allocation16 [shape = 's32[]', space=sflag, size = 0x4, offset = 0, fixed_abs, tag = 'sflag constant byte address 0x0 - dummy sync flag']
  #allocation17 [shape = 's32[]', space=sflag, size = 0x4, offset = 0, fixed_abs, tag = 'sflag constant byte address 0x0 - dummy sync flag']
  #allocation18 [shape = 's32[]', space=sflag, size = 0x4, offset = 0, fixed_abs, tag = 'sflag constant byte address 0x0 - dummy sync flag']
  #allocation19 [shape = 's32[]', space=sflag, size = 0x4, offset = 0, fixed_abs, tag = 'sflag constant byte address 0x0 - dummy sync flag']
  #allocation20 [shape = 's32[]', space=sflag, size = 0x4, offset = 0, fixed_abs, tag = 'sflag constant byte address 0x0 - dummy sync flag']
  #allocation21 [shape = 's32[]', space=sflag, size = 0x4, offset = 0, fixed_abs, tag = 'sflag constant byte address 0x0 - dummy sync flag']
  #allocation22 [shape = 's32[]', space=sflag, size = 0x4, offset = 0, fixed_abs, tag = 'sflag constant byte address 0x0 - dummy sync flag']
  #allocation23 [shape = 's32[]', space=sflag, size = 0x4, offset = 0, fixed_abs, tag = 'sflag constant byte address 0x0 - dummy sync flag']
  #allocation24 [shape = 's32[]', space=sflag, size = 0x4, offset = 0, fixed_abs, tag = 'sflag constant byte address 0x0 - dummy sync flag']
  #allocation25 [shape = 's32[]', space=sflag, size = 0x4, offset = 0, fixed_abs, tag = 'sflag constant byte address 0x0 - dummy sync flag']
  #allocation26 [shape = 's32[]', space=sflag, size = 0x4, offset = 0, fixed_abs, tag = 'sflag constant byte address 0x0 - dummy sync flag']
  #allocation27 [shape = 's32[]', space=sflag, size = 0x4, offset = 0, fixed_abs, tag = 'sflag constant byte address 0x0 - dummy sync flag']
  #allocation28 [shape = 's32[]', space=sflag, size = 0x4, offset = 0, fixed_abs, tag = 'sflag constant byte address 0x0 - dummy sync flag']
  #allocation29 [shape = 's32[]', space=sflag, size = 0x4, offset = 0, fixed_abs, tag = 'sflag constant byte address 0x0 - dummy sync flag']
  #allocation30 [shape = 's32[]', space=sflag, size = 0x4, offset = 0, fixed_abs, tag = 'sflag constant byte address 0x0 - dummy sync flag']
  #allocation31 [shape = 's32[]', space=sflag, size = 0x4, offset = 0, fixed_abs, tag = 'sflag constant byte address 0x0 - dummy sync flag']
  #allocation32 [shape = 's32[]', space=sflag, size = 0x4, offset = 0, fixed_abs, tag = 'sflag constant byte address 0x0 - dummy sync flag']
  #allocation33 [shape = 's32[]', space=sflag, size = 0x4, offset = 0, fixed_abs, tag = 'sflag constant byte address 0x0 - dummy sync flag']
  #allocation34 [shape = 's32[]', space=sflag, size = 0x4, offset = 0, fixed_abs, tag = 'sflag constant byte address 0x0 - dummy sync flag']
  #allocation35 [shape = 's32[]', space=sflag, size = 0x4, offset = 0, fixed_abs, tag = 'sflag constant byte address 0x0 - dummy sync flag']
  #allocation36 [shape = 's32[]', space=sflag, size = 0x4, offset = 0, fixed_abs, tag = 'sflag constant byte address 0x0 - dummy sync flag']
  #allocation37 [shape = 's32[]', space=sflag, size = 0x4, offset = 0, fixed_abs, tag = 'sflag constant byte address 0x0 - dummy sync flag']
  #allocation38 [shape = 's32[]', space=sflag, size = 0x4, offset = 0, fixed_abs, tag = 'sflag constant byte address 0x0 - dummy sync flag']
  #allocation39 [shape = 's32[]', space=sflag, size = 0x4, offset = 0, fixed_abs, tag = 'sflag constant byte address 0x0 - dummy sync flag']
  #allocation40 [shape = 's32[]', space=sflag, size = 0x4, offset = 0, fixed_abs, tag = 'sflag constant byte address 0x0 - dummy sync flag']
  #allocation41 [shape = 's32[]', space=sflag, size = 0x4, offset = 0, fixed_abs, tag = 'sflag constant byte address 0x0 - dummy sync flag']
  #allocation42 [shape = 's32[]', space=sflag, size = 0x4, offset = 0, fixed_abs, tag = 'sflag constant byte address 0x0 - dummy sync flag']
  #allocation43 [shape = 's32[]', space=sflag, size = 0x4, offset = 0, fixed_abs, tag = 'sflag constant byte address 0x0 - dummy sync flag']
  #allocation44 [shape = 's32[]', space=sflag, size = 0x4, offset = 0, fixed_abs, tag = 'sflag constant byte address 0x0 - dummy sync flag']
  #allocation45 [shape = 's32[]', space=sflag, size = 0x4, offset = 0, fixed_abs, tag = 'sflag constant byte address 0x0 - dummy sync flag']
  #allocation46 [shape = 's32[]', space=sflag, size = 0x4, offset = 0, fixed_abs, tag = 'sflag constant byte address 0x0 - dummy sync flag']
  #allocation47 [shape = 's32[]', space=sflag, size = 0x4, offset = 0, fixed_abs, tag = 'sflag constant byte address 0x0 - dummy sync flag']
  #allocation48 [shape = 's32[]', space=sflag, size = 0x4, offset = 0, fixed_abs, tag = 'sflag constant byte address 0x0 - dummy sync flag']
  #allocation49 [shape = 's32[]', space=sflag, size = 0x4, offset = 0, fixed_abs, tag = 'sflag constant byte address 0x0 - dummy sync flag']
  #allocation50 [shape = 's32[]', space=sflag, size = 0x4, offset = 0, fixed_abs, tag = 'sflag constant byte address 0x0 - dummy sync flag']
  #allocation51 [shape = 's32[]', space=sflag, size = 0x4, offset = 0, fixed_abs, tag = 'sflag constant byte address 0x0 - dummy sync flag']
  #allocation52 [shape = 's32[]', space=sflag, size = 0x4, offset = 0, fixed_abs, tag = 'sflag constant byte address 0x0 - dummy sync flag']
  #allocation53 [shape = 's32[]', space=sflag, size = 0x4, offset = 0, fixed_abs, tag = 'sflag constant byte address 0x0 - dummy sync flag']
  #allocation54 [shape = 's32[]', space=sflag, size = 0x4, offset = 0, fixed_abs, tag = 'sflag constant byte address 0x0 - dummy sync flag']
  #allocation55 [shape = 's32[]', space=sflag, size = 0x4, offset = 0, fixed_abs, tag = 'sflag constant byte address 0x0 - dummy sync flag']
  #allocation56 [shape = 's32[]', space=sflag, size = 0x4, offset = 0, fixed_abs, tag = 'sflag constant byte address 0x0 - dummy sync flag']
  #allocation57 [shape = 's32[]', space=sflag, size = 0x4, offset = 0, fixed_abs, tag = 'sflag constant byte address 0x0 - dummy sync flag']
  #allocation58 [shape = 's32[]', space=sflag, size = 0x4, offset = 0, fixed_abs, tag = 'sflag constant byte address 0x0 - dummy sync flag']
  #allocation59 [shape = 's32[]', space=sflag, size = 0x4, offset = 0, fixed_abs, tag = 'sflag constant byte address 0x0 - dummy sync flag']
  #allocation60 [shape = 's32[]', space=sflag, size = 0x4, offset = 0, fixed_abs, tag = 'sflag constant byte address 0x0 - dummy sync flag']
  #allocation61 [shape = 's32[]', space=sflag, size = 0x4, offset = 0, fixed_abs, tag = 'sflag constant byte address 0x0 - dummy sync flag']
  #allocation62 [shape = 's32[]', space=sflag, size = 0x4, offset = 0, fixed_abs, tag = 'sflag constant byte address 0x0 - dummy sync flag']
  #allocation63 [shape = 's32[]', space=sflag, size = 0x4, offset = 0, fixed_abs, tag = 'sflag constant byte address 0x0 - dummy sync flag']
  #allocation64 [shape = 's32[]', space=sflag, size = 0x4, offset = 0, fixed_abs, tag = 'sflag constant byte address 0x0 - dummy sync flag']
  #allocation65 [shape = 's32[]', space=sflag, size = 0x4, offset = 0, fixed_abs, tag = 'sflag constant byte address 0x0 - dummy sync flag']
  #allocation66 [shape = 's32[]', space=sflag, size = 0x4, offset = 0, fixed_abs, tag = 'sflag constant byte address 0x0 - dummy sync flag']
  #allocation67 [shape = 's32[]', space=sflag, size = 0x4, offset = 0, fixed_abs, tag = 'sflag constant byte address 0x0 - dummy sync flag']
  #allocation68 [shape = 's32[]', space=sflag, size = 0x4, offset = 0, fixed_abs, tag = 'sflag constant byte address 0x0 - dummy sync flag']
  #allocation69 [shape = 's32[]', space=sflag, size = 0x4, offset = 0, fixed_abs, tag = 'sflag constant byte address 0x0 - dummy sync flag']
  #allocation70 [shape = 's32[]', space=sflag, size = 0x4, offset = 0, fixed_abs, tag = 'sflag constant byte address 0x0 - dummy sync flag']
  #allocation71 [shape = 's32[]', space=sflag, size = 0x4, offset = 0, fixed_abs, tag = 'sflag constant byte address 0x0 - dummy sync flag']
  #allocation72 [shape = 's32[]', space=sflag, size = 0x4, offset = 0, fixed_abs, tag = 'sflag constant byte address 0x0 - dummy sync flag']
  #allocation73 [shape = 's32[]', space=sflag, size = 0x4, offset = 0, fixed_abs, tag = 'sflag constant byte address 0x0 - dummy sync flag']
  %s0 = inlined_call_operand.hbm [shape: s32[16], index: 0, kind: input, shape index: {}]
  %s1 = inlined_call_operand.hbm [shape: f32[32,128], index: 1, kind: input, shape index: {}]
  %s2 = inlined_call_operand.hbm [shape: f32[16,128], index: 2, kind: output, shape index: {}]
  %s3 = sld [smem:[#allocation0]]
  $region146: #{tpu_custom_call.1} parent=0
    _
  %s5 = ssub.s32 1, %s3
  %s6 = scalar_select 0, %s5, %s3
  %8 = dma.hbm_to_smem %s0, 16, [#allocation5], [#allocation4]
  %9 = dma.done [#allocation4], 16
  %10 = sfence
  $region1: #{tpu_custom_call.1} parent=0
    #allocation6 [shape = 'u8[8192]{0}', space=vmem, size = 0x2000, scoped, tag = 'output window, operand 0, single buffered']
    #allocation7 [shape = 's32[1]{0}', space=sflag, size = 0x4, scoped, tag = 'scoped memory for tpu_custom_call.1']
    %11 = vsyncpa [#allocation7], 0
    %s12 = ssub.s32 0, 0
    %s13 = ssub.s32 0, 0
    %p14 = scmp.ne.s32.totalorder 0, 0
    %p15 = scmp.lt.s32.totalorder 0, 0
    %p16 = pnand %p15, %p14
    %p17 = pneg %p16
    %s18 = sadd.s32 0, 2
    %s19 = scalar_select %p17, %s18, 0
    %p20 = scmp.eq.s32.totalorder 0, 0
    // Predicated region
    $region2: #{tpu_custom_call.1} parent=1 // pred_check
      %p21 = pneg %p20
    $region3: #{tpu_custom_call.1} parent=1 // pred_check_branch
      %23 = sbr.rel (%p21) target = $region5
    $region4: #{tpu_custom_call.1} parent=1 // pred_region
      %s24 = smul.u32 0, 16
      %s25 = sld [smem:[#allocation5 + %s24]]
      %s26 = smul.addr %s25, 16
      %s27 = scalar_lea.hbm %s1, %s26
      %s28 = smul.u32 %s19, 16
      %s29 = scalar_lea.vmem [#allocation2], %s28
      %s30 = scalar_lea.sflag [#allocation3], %s28
      // Predicated region
      $region6: #{tpu_custom_call.1} parent=4 // pred_check
        _
      $region7: #{tpu_custom_call.1} parent=4 // pred_check_branch
        %32 = sbr.rel target = $region9
      $region8: #{tpu_custom_call.1} parent=4 // pred_region
        %33 = sst [smem:[#allocation10]] [#allocation9]
        %34 = sst [smem:[#allocation11]] [#allocation8]
      $region9: #{tpu_custom_call.1} parent=4 // pred_fallthru
        _
      %36 = shalt.err (0)
      %s38 = sshll.u32 %s29, 4
      %s39 = int_to_ptr.vmem [resolvable:$true] %s38
      %41 = dma.hbm_to_vmem [thread:$0]  %s27, 16, %s39, %s30
      %s42 = sadd.s32 %s24, 1
      %s43 = sld [smem:[#allocation5 + %s42]]
      %s44 = smul.addr %s43, 16
      %s45 = scalar_lea.hbm %s1, %s44
      %s46 = sadd.s32 1, %s28
      %s47 = scalar_lea.vmem [#allocation2], %s46
      %s48 = scalar_lea.sflag [#allocation3], %s46
      // Predicated region
      $region10: #{tpu_custom_call.1} parent=4 // pred_check
        _
      $region11: #{tpu_custom_call.1} parent=4 // pred_check_branch
        %50 = sbr.rel target = $region13
      $region12: #{tpu_custom_call.1} parent=4 // pred_region
        %51 = sst [smem:[#allocation10]] [#allocation13]
        %52 = sst [smem:[#allocation11]] [#allocation12]
      $region13: #{tpu_custom_call.1} parent=4 // pred_fallthru
        _
      %54 = shalt.err (0)
      %s56 = sshll.u32 %s47, 4
      %s57 = int_to_ptr.vmem [resolvable:$true] %s56
      %59 = dma.hbm_to_vmem [thread:$0]  %s45, 16, %s57, %s48
      %s60 = sadd.s32 %s24, 2
      %s61 = sld [smem:[#allocation5 + %s60]]
      %s62 = smul.addr %s61, 16
      %s63 = scalar_lea.hbm %s1, %s62
      %s64 = sadd.s32 2, %s28
      %s65 = scalar_lea.vmem [#allocation2], %s64
      %s66 = scalar_lea.sflag [#allocation3], %s64
      // Predicated region
      $region14: #{tpu_custom_call.1} parent=4 // pred_check
        _
      $region15: #{tpu_custom_call.1} parent=4 // pred_check_branch
        %68 = sbr.rel target = $region17
      $region16: #{tpu_custom_call.1} parent=4 // pred_region
        %69 = sst [smem:[#allocation10]] [#allocation15]
        %70 = sst [smem:[#allocation11]] [#allocation14]
      $region17: #{tpu_custom_call.1} parent=4 // pred_fallthru
        _
      %72 = shalt.err (0)
      %s74 = sshll.u32 %s65, 4
      %s75 = int_to_ptr.vmem [resolvable:$true] %s74
      %77 = dma.hbm_to_vmem [thread:$0]  %s63, 16, %s75, %s66
      %s78 = sadd.s32 %s24, 3
      %s79 = sld [smem:[#allocation5 + %s78]]
      %s80 = smul.addr %s79, 16
      %s81 = scalar_lea.hbm %s1, %s80
      %s82 = sadd.s32 3, %s28
      %s83 = scalar_lea.vmem [#allocation2], %s82
      %s84 = scalar_lea.sflag [#allocation3], %s82
      // Predicated region
      $region18: #{tpu_custom_call.1} parent=4 // pred_check
        _
      $region19: #{tpu_custom_call.1} parent=4 // pred_check_branch
        %86 = sbr.rel target = $region21
      $region20: #{tpu_custom_call.1} parent=4 // pred_region
        %87 = sst [smem:[#allocation10]] [#allocation17]
        %88 = sst [smem:[#allocation11]] [#allocation16]
      $region21: #{tpu_custom_call.1} parent=4 // pred_fallthru
        _
      %90 = shalt.err (0)
      %s92 = sshll.u32 %s83, 4
      %s93 = int_to_ptr.vmem [resolvable:$true] %s92
      %95 = dma.hbm_to_vmem [thread:$0]  %s81, 16, %s93, %s84
      %s96 = sadd.s32 %s24, 4
      %s97 = sld [smem:[#allocation5 + %s96]]
      %s98 = smul.addr %s97, 16
      %s99 = scalar_lea.hbm %s1, %s98
      %s100 = sadd.s32 4, %s28
      %s101 = scalar_lea.vmem [#allocation2], %s100
      %s102 = scalar_lea.sflag [#allocation3], %s100
      // Predicated region
      $region22: #{tpu_custom_call.1} parent=4 // pred_check
        _
      $region23: #{tpu_custom_call.1} parent=4 // pred_check_branch
        %104 = sbr.rel target = $region25
      $region24: #{tpu_custom_call.1} parent=4 // pred_region
        %105 = sst [smem:[#allocation10]] [#allocation19]
        %106 = sst [smem:[#allocation11]] [#allocation18]
      $region25: #{tpu_custom_call.1} parent=4 // pred_fallthru
        _
      %108 = shalt.err (0)
      %s110 = sshll.u32 %s101, 4
      %s111 = int_to_ptr.vmem [resolvable:$true] %s110
      %113 = dma.hbm_to_vmem [thread:$0]  %s99, 16, %s111, %s102
      %s114 = sadd.s32 %s24, 5
      %s115 = sld [smem:[#allocation5 + %s114]]
      %s116 = smul.addr %s115, 16
      %s117 = scalar_lea.hbm %s1, %s116
      %s118 = sadd.s32 5, %s28
      %s119 = scalar_lea.vmem [#allocation2], %s118
      %s120 = scalar_lea.sflag [#allocation3], %s118
      // Predicated region
      $region26: #{tpu_custom_call.1} parent=4 // pred_check
        _
      $region27: #{tpu_custom_call.1} parent=4 // pred_check_branch
        %122 = sbr.rel target = $region29
      $region28: #{tpu_custom_call.1} parent=4 // pred_region
        %123 = sst [smem:[#allocation10]] [#allocation21]
        %124 = sst [smem:[#allocation11]] [#allocation20]
      $region29: #{tpu_custom_call.1} parent=4 // pred_fallthru
        _
      %126 = shalt.err (0)
      %s128 = sshll.u32 %s119, 4
      %s129 = int_to_ptr.vmem [resolvable:$true] %s128
      %131 = dma.hbm_to_vmem [thread:$0]  %s117, 16, %s129, %s120
      %s132 = sadd.s32 %s24, 6
      %s133 = sld [smem:[#allocation5 + %s132]]
      %s134 = smul.addr %s133, 16
      %s135 = scalar_lea.hbm %s1, %s134
      %s136 = sadd.s32 6, %s28
      %s137 = scalar_lea.vmem [#allocation2], %s136
      %s138 = scalar_lea.sflag [#allocation3], %s136
      // Predicated region
      $region30: #{tpu_custom_call.1} parent=4 // pred_check
        _
      $region31: #{tpu_custom_call.1} parent=4 // pred_check_branch
        %140 = sbr.rel target = $region33
      $region32: #{tpu_custom_call.1} parent=4 // pred_region
        %141 = sst [smem:[#allocation10]] [#allocation23]
        %142 = sst [smem:[#allocation11]] [#allocation22]
      $region33: #{tpu_custom_call.1} parent=4 // pred_fallthru
        _
      %144 = shalt.err (0)
      %s146 = sshll.u32 %s137, 4
      %s147 = int_to_ptr.vmem [resolvable:$true] %s146
      %149 = dma.hbm_to_vmem [thread:$0]  %s135, 16, %s147, %s138
      %s150 = sadd.s32 %s24, 7
      %s151 = sld [smem:[#allocation5 + %s150]]
      %s152 = smul.addr %s151, 16
      %s153 = scalar_lea.hbm %s1, %s152
      %s154 = sadd.s32 7, %s28
      %s155 = scalar_lea.vmem [#allocation2], %s154
      %s156 = scalar_lea.sflag [#allocation3], %s154
      // Predicated region
      $region34: #{tpu_custom_call.1} parent=4 // pred_check
        _
      $region35: #{tpu_custom_call.1} parent=4 // pred_check_branch
        %158 = sbr.rel target = $region37
      $region36: #{tpu_custom_call.1} parent=4 // pred_region
        %159 = sst [smem:[#allocation10]] [#allocation25]
        %160 = sst [smem:[#allocation11]] [#allocation24]
      $region37: #{tpu_custom_call.1} parent=4 // pred_fallthru
        _
      %162 = shalt.err (0)
      %s164 = sshll.u32 %s155, 4
      %s165 = int_to_ptr.vmem [resolvable:$true] %s164
      %167 = dma.hbm_to_vmem [thread:$0]  %s153, 16, %s165, %s156
      %s168 = sadd.s32 %s24, 8
      %s169 = sld [smem:[#allocation5 + %s168]]
      %s170 = smul.addr %s169, 16
      %s171 = scalar_lea.hbm %s1, %s170
      %s172 = sadd.s32 8, %s28
      %s173 = scalar_lea.vmem [#allocation2], %s172
      %s174 = scalar_lea.sflag [#allocation3], %s172
      // Predicated region
      $region38: #{tpu_custom_call.1} parent=4 // pred_check
        _
      $region39: #{tpu_custom_call.1} parent=4 // pred_check_branch
        %176 = sbr.rel target = $region41
      $region40: #{tpu_custom_call.1} parent=4 // pred_region
        %177 = sst [smem:[#allocation10]] [#allocation27]
        %178 = sst [smem:[#allocation11]] [#allocation26]
      $region41: #{tpu_custom_call.1} parent=4 // pred_fallthru
        _
      %180 = shalt.err (0)
      %s182 = sshll.u32 %s173, 4
      %s183 = int_to_ptr.vmem [resolvable:$true] %s182
      %185 = dma.hbm_to_vmem [thread:$0]  %s171, 16, %s183, %s174
      %s186 = sadd.s32 %s24, 9
      %s187 = sld [smem:[#allocation5 + %s186]]
      %s188 = smul.addr %s187, 16
      %s189 = scalar_lea.hbm %s1, %s188
      %s190 = sadd.s32 9, %s28
      %s191 = scalar_lea.vmem [#allocation2], %s190
      %s192 = scalar_lea.sflag [#allocation3], %s190
      // Predicated region
      $region42: #{tpu_custom_call.1} parent=4 // pred_check
        _
      $region43: #{tpu_custom_call.1} parent=4 // pred_check_branch
        %194 = sbr.rel target = $region45
      $region44: #{tpu_custom_call.1} parent=4 // pred_region
        %195 = sst [smem:[#allocation10]] [#allocation29]
        %196 = sst [smem:[#allocation11]] [#allocation28]
      $region45: #{tpu_custom_call.1} parent=4 // pred_fallthru
        _
      %198 = shalt.err (0)
      %s200 = sshll.u32 %s191, 4
      %s201 = int_to_ptr.vmem [resolvable:$true] %s200
      %203 = dma.hbm_to_vmem [thread:$0]  %s189, 16, %s201, %s192
      %s204 = sadd.s32 %s24, 10
      %s205 = sld [smem:[#allocation5 + %s204]]
      %s206 = smul.addr %s205, 16
      %s207 = scalar_lea.hbm %s1, %s206
      %s208 = sadd.s32 10, %s28
      %s209 = scalar_lea.vmem [#allocation2], %s208
      %s210 = scalar_lea.sflag [#allocation3], %s208
      // Predicated region
      $region46: #{tpu_custom_call.1} parent=4 // pred_check
        _
      $region47: #{tpu_custom_call.1} parent=4 // pred_check_branch
        %212 = sbr.rel target = $region49
      $region48: #{tpu_custom_call.1} parent=4 // pred_region
        %213 = sst [smem:[#allocation10]] [#allocation31]
        %214 = sst [smem:[#allocation11]] [#allocation30]
      $region49: #{tpu_custom_call.1} parent=4 // pred_fallthru
        _
      %216 = shalt.err (0)
      %s218 = sshll.u32 %s209, 4
      %s219 = int_to_ptr.vmem [resolvable:$true] %s218
      %221 = dma.hbm_to_vmem [thread:$0]  %s207, 16, %s219, %s210
      %s222 = sadd.s32 %s24, 11
      %s223 = sld [smem:[#allocation5 + %s222]]
      %s224 = smul.addr %s223, 16
      %s225 = scalar_lea.hbm %s1, %s224
      %s226 = sadd.s32 11, %s28
      %s227 = scalar_lea.vmem [#allocation2], %s226
      %s228 = scalar_lea.sflag [#allocation3], %s226
      // Predicated region
      $region50: #{tpu_custom_call.1} parent=4 // pred_check
        _
      $region51: #{tpu_custom_call.1} parent=4 // pred_check_branch
        %230 = sbr.rel target = $region53
      $region52: #{tpu_custom_call.1} parent=4 // pred_region
        %231 = sst [smem:[#allocation10]] [#allocation33]
        %232 = sst [smem:[#allocation11]] [#allocation32]
      $region53: #{tpu_custom_call.1} parent=4 // pred_fallthru
        _
      %234 = shalt.err (0)
      %s236 = sshll.u32 %s227, 4
      %s237 = int_to_ptr.vmem [resolvable:$true] %s236
      %239 = dma.hbm_to_vmem [thread:$0]  %s225, 16, %s237, %s228
      %s240 = sadd.s32 %s24, 12
      %s241 = sld [smem:[#allocation5 + %s240]]
      %s242 = smul.addr %s241, 16
      %s243 = scalar_lea.hbm %s1, %s242
      %s244 = sadd.s32 12, %s28
      %s245 = scalar_lea.vmem [#allocation2], %s244
      %s246 = scalar_lea.sflag [#allocation3], %s244
      // Predicated region
      $region54: #{tpu_custom_call.1} parent=4 // pred_check
        _
      $region55: #{tpu_custom_call.1} parent=4 // pred_check_branch
        %248 = sbr.rel target = $region57
      $region56: #{tpu_custom_call.1} parent=4 // pred_region
        %249 = sst [smem:[#allocation10]] [#allocation35]
        %250 = sst [smem:[#allocation11]] [#allocation34]
      $region57: #{tpu_custom_call.1} parent=4 // pred_fallthru
        _
      %252 = shalt.err (0)
      %s254 = sshll.u32 %s245, 4
      %s255 = int_to_ptr.vmem [resolvable:$true] %s254
      %257 = dma.hbm_to_vmem [thread:$0]  %s243, 16, %s255, %s246
      %s258 = sadd.s32 %s24, 13
      %s259 = sld [smem:[#allocation5 + %s258]]
      %s260 = smul.addr %s259, 16
      %s261 = scalar_lea.hbm %s1, %s260
      %s262 = sadd.s32 13, %s28
      %s263 = scalar_lea.vmem [#allocation2], %s262
      %s264 = scalar_lea.sflag [#allocation3], %s262
      // Predicated region
      $region58: #{tpu_custom_call.1} parent=4 // pred_check
        _
      $region59: #{tpu_custom_call.1} parent=4 // pred_check_branch
        %266 = sbr.rel target = $region61
      $region60: #{tpu_custom_call.1} parent=4 // pred_region
        %267 = sst [smem:[#allocation10]] [#allocation37]
        %268 = sst [smem:[#allocation11]] [#allocation36]
      $region61: #{tpu_custom_call.1} parent=4 // pred_fallthru
        _
      %270 = shalt.err (0)
      %s272 = sshll.u32 %s263, 4
      %s273 = int_to_ptr.vmem [resolvable:$true] %s272
      %275 = dma.hbm_to_vmem [thread:$0]  %s261, 16, %s273, %s264
      %s276 = sadd.s32 %s24, 14
      %s277 = sld [smem:[#allocation5 + %s276]]
      %s278 = smul.addr %s277, 16
      %s279 = scalar_lea.hbm %s1, %s278
      %s280 = sadd.s32 14, %s28
      %s281 = scalar_lea.vmem [#allocation2], %s280
      %s282 = scalar_lea.sflag [#allocation3], %s280
      // Predicated region
      $region62: #{tpu_custom_call.1} parent=4 // pred_check
        _
      $region63: #{tpu_custom_call.1} parent=4 // pred_check_branch
        %284 = sbr.rel target = $region65
      $region64: #{tpu_custom_call.1} parent=4 // pred_region
        %285 = sst [smem:[#allocation10]] [#allocation39]
        %286 = sst [smem:[#allocation11]] [#allocation38]
      $region65: #{tpu_custom_call.1} parent=4 // pred_fallthru
        _
      %288 = shalt.err (0)
      %s290 = sshll.u32 %s281, 4
      %s291 = int_to_ptr.vmem [resolvable:$true] %s290
      %293 = dma.hbm_to_vmem [thread:$0]  %s279, 16, %s291, %s282
      %s294 = sadd.s32 %s24, 15
      %s295 = sld [smem:[#allocation5 + %s294]]
      %s296 = smul.addr %s295, 16
      %s297 = scalar_lea.hbm %s1, %s296
      %s298 = sadd.s32 15, %s28
      %s299 = scalar_lea.vmem [#allocation2], %s298
      %s300 = scalar_lea.sflag [#allocation3], %s298
      // Predicated region
      $region66: #{tpu_custom_call.1} parent=4 // pred_check
        _
      $region67: #{tpu_custom_call.1} parent=4 // pred_check_branch
        %302 = sbr.rel target = $region69
      $region68: #{tpu_custom_call.1} parent=4 // pred_region
        %303 = sst [smem:[#allocation10]] [#allocation41]
        %304 = sst [smem:[#allocation11]] [#allocation40]
      $region69: #{tpu_custom_call.1} parent=4 // pred_fallthru
        _
      %306 = shalt.err (0)
      %s308 = sshll.u32 %s299, 4
      %s309 = int_to_ptr.vmem [resolvable:$true] %s308
      %311 = dma.hbm_to_vmem [thread:$0]  %s297, 16, %s309, %s300
    $region5: #{tpu_custom_call.1} parent=1 // pred_fallthru
      _
    %s312 = sadd.s32 0, 1
    %p313 = scmp.lt.s32.totalorder %s312, 1
    // Predicated region
    $region70: #{tpu_custom_call.1} parent=1 // pred_check
      %p314 = pneg %p313
    $region71: #{tpu_custom_call.1} parent=1 // pred_check_branch
      %316 = sbr.rel (%p314) target = $region73
    $region72: #{tpu_custom_call.1} parent=1 // pred_region
      %s317 = ssub.s32 1, %s19
      %s318 = smul.u32 %s312, 16
      %s319 = sld [smem:[#allocation5 + %s318]]
      %s320 = smul.addr %s319, 16
      %s321 = scalar_lea.hbm %s1, %s320
      %s322 = smul.u32 %s317, 16
      %s323 = scalar_lea.vmem [#allocation2], %s322
      %s324 = scalar_lea.sflag [#allocation3], %s322
      // Predicated region
      $region74: #{tpu_custom_call.1} parent=72 // pred_check
        _
      $region75: #{tpu_custom_call.1} parent=72 // pred_check_branch
        %326 = sbr.rel target = $region77
      $region76: #{tpu_custom_call.1} parent=72 // pred_region
        %327 = sst [smem:[#allocation10]] [#allocation43]
        %328 = sst [smem:[#allocation11]] [#allocation42]
      $region77: #{tpu_custom_call.1} parent=72 // pred_fallthru
        _
      %330 = shalt.err (0)
      %s332 = sshll.u32 %s323, 4
      %s333 = int_to_ptr.vmem [resolvable:$true] %s332
      %335 = dma.hbm_to_vmem [thread:$0]  %s321, 16, %s333, %s324
      %s336 = sadd.s32 %s318, 1
      %s337 = sld [smem:[#allocation5 + %s336]]
      %s338 = smul.addr %s337, 16
      %s339 = scalar_lea.hbm %s1, %s338
      %s340 = sadd.s32 1, %s322
      %s341 = scalar_lea.vmem [#allocation2], %s340
      %s342 = scalar_lea.sflag [#allocation3], %s340
      // Predicated region
      $region78: #{tpu_custom_call.1} parent=72 // pred_check
        _
      $region79: #{tpu_custom_call.1} parent=72 // pred_check_branch
        %344 = sbr.rel target = $region81
      $region80: #{tpu_custom_call.1} parent=72 // pred_region
        %345 = sst [smem:[#allocation10]] [#allocation45]
        %346 = sst [smem:[#allocation11]] [#allocation44]
      $region81: #{tpu_custom_call.1} parent=72 // pred_fallthru
        _
      %348 = shalt.err (0)
      %s350 = sshll.u32 %s341, 4
      %s351 = int_to_ptr.vmem [resolvable:$true] %s350
      %353 = dma.hbm_to_vmem [thread:$0]  %s339, 16, %s351, %s342
      %s354 = sadd.s32 %s318, 2
      %s355 = sld [smem:[#allocation5 + %s354]]
      %s356 = smul.addr %s355, 16
      %s357 = scalar_lea.hbm %s1, %s356
      %s358 = sadd.s32 2, %s322
      %s359 = scalar_lea.vmem [#allocation2], %s358
      %s360 = scalar_lea.sflag [#allocation3], %s358
      // Predicated region
      $region82: #{tpu_custom_call.1} parent=72 // pred_check
        _
      $region83: #{tpu_custom_call.1} parent=72 // pred_check_branch
        %362 = sbr.rel target = $region85
      $region84: #{tpu_custom_call.1} parent=72 // pred_region
        %363 = sst [smem:[#allocation10]] [#allocation47]
        %364 = sst [smem:[#allocation11]] [#allocation46]
      $region85: #{tpu_custom_call.1} parent=72 // pred_fallthru
        _
      %366 = shalt.err (0)
      %s368 = sshll.u32 %s359, 4
      %s369 = int_to_ptr.vmem [resolvable:$true] %s368
      %371 = dma.hbm_to_vmem [thread:$0]  %s357, 16, %s369, %s360
      %s372 = sadd.s32 %s318, 3
      %s373 = sld [smem:[#allocation5 + %s372]]
      %s374 = smul.addr %s373, 16
      %s375 = scalar_lea.hbm %s1, %s374
      %s376 = sadd.s32 3, %s322
      %s377 = scalar_lea.vmem [#allocation2], %s376
      %s378 = scalar_lea.sflag [#allocation3], %s376
      // Predicated region
      $region86: #{tpu_custom_call.1} parent=72 // pred_check
        _
      $region87: #{tpu_custom_call.1} parent=72 // pred_check_branch
        %380 = sbr.rel target = $region89
      $region88: #{tpu_custom_call.1} parent=72 // pred_region
        %381 = sst [smem:[#allocation10]] [#allocation49]
        %382 = sst [smem:[#allocation11]] [#allocation48]
      $region89: #{tpu_custom_call.1} parent=72 // pred_fallthru
        _
      %384 = shalt.err (0)
      %s386 = sshll.u32 %s377, 4
      %s387 = int_to_ptr.vmem [resolvable:$true] %s386
      %389 = dma.hbm_to_vmem [thread:$0]  %s375, 16, %s387, %s378
      %s390 = sadd.s32 %s318, 4
      %s391 = sld [smem:[#allocation5 + %s390]]
      %s392 = smul.addr %s391, 16
      %s393 = scalar_lea.hbm %s1, %s392
      %s394 = sadd.s32 4, %s322
      %s395 = scalar_lea.vmem [#allocation2], %s394
      %s396 = scalar_lea.sflag [#allocation3], %s394
      // Predicated region
      $region90: #{tpu_custom_call.1} parent=72 // pred_check
        _
      $region91: #{tpu_custom_call.1} parent=72 // pred_check_branch
        %398 = sbr.rel target = $region93
      $region92: #{tpu_custom_call.1} parent=72 // pred_region
        %399 = sst [smem:[#allocation10]] [#allocation51]
        %400 = sst [smem:[#allocation11]] [#allocation50]
      $region93: #{tpu_custom_call.1} parent=72 // pred_fallthru
        _
      %402 = shalt.err (0)
      %s404 = sshll.u32 %s395, 4
      %s405 = int_to_ptr.vmem [resolvable:$true] %s404
      %407 = dma.hbm_to_vmem [thread:$0]  %s393, 16, %s405, %s396
      %s408 = sadd.s32 %s318, 5
      %s409 = sld [smem:[#allocation5 + %s408]]
      %s410 = smul.addr %s409, 16
      %s411 = scalar_lea.hbm %s1, %s410
      %s412 = sadd.s32 5, %s322
      %s413 = scalar_lea.vmem [#allocation2], %s412
      %s414 = scalar_lea.sflag [#allocation3], %s412
      // Predicated region
      $region94: #{tpu_custom_call.1} parent=72 // pred_check
        _
      $region95: #{tpu_custom_call.1} parent=72 // pred_check_branch
        %416 = sbr.rel target = $region97
      $region96: #{tpu_custom_call.1} parent=72 // pred_region
        %417 = sst [smem:[#allocation10]] [#allocation53]
        %418 = sst [smem:[#allocation11]] [#allocation52]
      $region97: #{tpu_custom_call.1} parent=72 // pred_fallthru
        _
      %420 = shalt.err (0)
      %s422 = sshll.u32 %s413, 4
      %s423 = int_to_ptr.vmem [resolvable:$true] %s422
      %425 = dma.hbm_to_vmem [thread:$0]  %s411, 16, %s423, %s414
      %s426 = sadd.s32 %s318, 6
      %s427 = sld [smem:[#allocation5 + %s426]]
      %s428 = smul.addr %s427, 16
      %s429 = scalar_lea.hbm %s1, %s428
      %s430 = sadd.s32 6, %s322
      %s431 = scalar_lea.vmem [#allocation2], %s430
      %s432 = scalar_lea.sflag [#allocation3], %s430
      // Predicated region
      $region98: #{tpu_custom_call.1} parent=72 // pred_check
        _
      $region99: #{tpu_custom_call.1} parent=72 // pred_check_branch
        %434 = sbr.rel target = $region101
      $region100: #{tpu_custom_call.1} parent=72 // pred_region
        %435 = sst [smem:[#allocation10]] [#allocation55]
        %436 = sst [smem:[#allocation11]] [#allocation54]
      $region101: #{tpu_custom_call.1} parent=72 // pred_fallthru
        _
      %438 = shalt.err (0)
      %s440 = sshll.u32 %s431, 4
      %s441 = int_to_ptr.vmem [resolvable:$true] %s440
      %443 = dma.hbm_to_vmem [thread:$0]  %s429, 16, %s441, %s432
      %s444 = sadd.s32 %s318, 7
      %s445 = sld [smem:[#allocation5 + %s444]]
      %s446 = smul.addr %s445, 16
      %s447 = scalar_lea.hbm %s1, %s446
      %s448 = sadd.s32 7, %s322
      %s449 = scalar_lea.vmem [#allocation2], %s448
      %s450 = scalar_lea.sflag [#allocation3], %s448
      // Predicated region
      $region102: #{tpu_custom_call.1} parent=72 // pred_check
        _
      $region103: #{tpu_custom_call.1} parent=72 // pred_check_branch
        %452 = sbr.rel target = $region105
      $region104: #{tpu_custom_call.1} parent=72 // pred_region
        %453 = sst [smem:[#allocation10]] [#allocation57]
        %454 = sst [smem:[#allocation11]] [#allocation56]
      $region105: #{tpu_custom_call.1} parent=72 // pred_fallthru
        _
      %456 = shalt.err (0)
      %s458 = sshll.u32 %s449, 4
      %s459 = int_to_ptr.vmem [resolvable:$true] %s458
      %461 = dma.hbm_to_vmem [thread:$0]  %s447, 16, %s459, %s450
      %s462 = sadd.s32 %s318, 8
      %s463 = sld [smem:[#allocation5 + %s462]]
      %s464 = smul.addr %s463, 16
      %s465 = scalar_lea.hbm %s1, %s464
      %s466 = sadd.s32 8, %s322
      %s467 = scalar_lea.vmem [#allocation2], %s466
      %s468 = scalar_lea.sflag [#allocation3], %s466
      // Predicated region
      $region106: #{tpu_custom_call.1} parent=72 // pred_check
        _
      $region107: #{tpu_custom_call.1} parent=72 // pred_check_branch
        %470 = sbr.rel target = $region109
      $region108: #{tpu_custom_call.1} parent=72 // pred_region
        %471 = sst [smem:[#allocation10]] [#allocation59]
        %472 = sst [smem:[#allocation11]] [#allocation58]
      $region109: #{tpu_custom_call.1} parent=72 // pred_fallthru
        _
      %474 = shalt.err (0)
      %s476 = sshll.u32 %s467, 4
      %s477 = int_to_ptr.vmem [resolvable:$true] %s476
      %479 = dma.hbm_to_vmem [thread:$0]  %s465, 16, %s477, %s468
      %s480 = sadd.s32 %s318, 9
      %s481 = sld [smem:[#allocation5 + %s480]]
      %s482 = smul.addr %s481, 16
      %s483 = scalar_lea.hbm %s1, %s482
      %s484 = sadd.s32 9, %s322
      %s485 = scalar_lea.vmem [#allocation2], %s484
      %s486 = scalar_lea.sflag [#allocation3], %s484
      // Predicated region
      $region110: #{tpu_custom_call.1} parent=72 // pred_check
        _
      $region111: #{tpu_custom_call.1} parent=72 // pred_check_branch
        %488 = sbr.rel target = $region113
      $region112: #{tpu_custom_call.1} parent=72 // pred_region
        %489 = sst [smem:[#allocation10]] [#allocation61]
        %490 = sst [smem:[#allocation11]] [#allocation60]
      $region113: #{tpu_custom_call.1} parent=72 // pred_fallthru
        _
      %492 = shalt.err (0)
      %s494 = sshll.u32 %s485, 4
      %s495 = int_to_ptr.vmem [resolvable:$true] %s494
      %497 = dma.hbm_to_vmem [thread:$0]  %s483, 16, %s495, %s486
      %s498 = sadd.s32 %s318, 10
      %s499 = sld [smem:[#allocation5 + %s498]]
      %s500 = smul.addr %s499, 16
      %s501 = scalar_lea.hbm %s1, %s500
      %s502 = sadd.s32 10, %s322
      %s503 = scalar_lea.vmem [#allocation2], %s502
      %s504 = scalar_lea.sflag [#allocation3], %s502
      // Predicated region
      $region114: #{tpu_custom_call.1} parent=72 // pred_check
        _
      $region115: #{tpu_custom_call.1} parent=72 // pred_check_branch
        %506 = sbr.rel target = $region117
      $region116: #{tpu_custom_call.1} parent=72 // pred_region
        %507 = sst [smem:[#allocation10]] [#allocation63]
        %508 = sst [smem:[#allocation11]] [#allocation62]
      $region117: #{tpu_custom_call.1} parent=72 // pred_fallthru
        _
      %510 = shalt.err (0)
      %s512 = sshll.u32 %s503, 4
      %s513 = int_to_ptr.vmem [resolvable:$true] %s512
      %515 = dma.hbm_to_vmem [thread:$0]  %s501, 16, %s513, %s504
      %s516 = sadd.s32 %s318, 11
      %s517 = sld [smem:[#allocation5 + %s516]]
      %s518 = smul.addr %s517, 16
      %s519 = scalar_lea.hbm %s1, %s518
      %s520 = sadd.s32 11, %s322
      %s521 = scalar_lea.vmem [#allocation2], %s520
      %s522 = scalar_lea.sflag [#allocation3], %s520
      // Predicated region
      $region118: #{tpu_custom_call.1} parent=72 // pred_check
        _
      $region119: #{tpu_custom_call.1} parent=72 // pred_check_branch
        %524 = sbr.rel target = $region121
      $region120: #{tpu_custom_call.1} parent=72 // pred_region
        %525 = sst [smem:[#allocation10]] [#allocation65]
        %526 = sst [smem:[#allocation11]] [#allocation64]
      $region121: #{tpu_custom_call.1} parent=72 // pred_fallthru
        _
      %528 = shalt.err (0)
      %s530 = sshll.u32 %s521, 4
      %s531 = int_to_ptr.vmem [resolvable:$true] %s530
      %533 = dma.hbm_to_vmem [thread:$0]  %s519, 16, %s531, %s522
      %s534 = sadd.s32 %s318, 12
      %s535 = sld [smem:[#allocation5 + %s534]]
      %s536 = smul.addr %s535, 16
      %s537 = scalar_lea.hbm %s1, %s536
      %s538 = sadd.s32 12, %s322
      %s539 = scalar_lea.vmem [#allocation2], %s538
      %s540 = scalar_lea.sflag [#allocation3], %s538
      // Predicated region
      $region122: #{tpu_custom_call.1} parent=72 // pred_check
        _
      $region123: #{tpu_custom_call.1} parent=72 // pred_check_branch
        %542 = sbr.rel target = $region125
      $region124: #{tpu_custom_call.1} parent=72 // pred_region
        %543 = sst [smem:[#allocation10]] [#allocation67]
        %544 = sst [smem:[#allocation11]] [#allocation66]
      $region125: #{tpu_custom_call.1} parent=72 // pred_fallthru
        _
      %546 = shalt.err (0)
      %s548 = sshll.u32 %s539, 4
      %s549 = int_to_ptr.vmem [resolvable:$true] %s548
      %551 = dma.hbm_to_vmem [thread:$0]  %s537, 16, %s549, %s540
      %s552 = sadd.s32 %s318, 13
      %s553 = sld [smem:[#allocation5 + %s552]]
      %s554 = smul.addr %s553, 16
      %s555 = scalar_lea.hbm %s1, %s554
      %s556 = sadd.s32 13, %s322
      %s557 = scalar_lea.vmem [#allocation2], %s556
      %s558 = scalar_lea.sflag [#allocation3], %s556
      // Predicated region
      $region126: #{tpu_custom_call.1} parent=72 // pred_check
        _
      $region127: #{tpu_custom_call.1} parent=72 // pred_check_branch
        %560 = sbr.rel target = $region129
      $region128: #{tpu_custom_call.1} parent=72 // pred_region
        %561 = sst [smem:[#allocation10]] [#allocation69]
        %562 = sst [smem:[#allocation11]] [#allocation68]
      $region129: #{tpu_custom_call.1} parent=72 // pred_fallthru
        _
      %564 = shalt.err (0)
      %s566 = sshll.u32 %s557, 4
      %s567 = int_to_ptr.vmem [resolvable:$true] %s566
      %569 = dma.hbm_to_vmem [thread:$0]  %s555, 16, %s567, %s558
      %s570 = sadd.s32 %s318, 14
      %s571 = sld [smem:[#allocation5 + %s570]]
      %s572 = smul.addr %s571, 16
      %s573 = scalar_lea.hbm %s1, %s572
      %s574 = sadd.s32 14, %s322
      %s575 = scalar_lea.vmem [#allocation2], %s574
      %s576 = scalar_lea.sflag [#allocation3], %s574
      // Predicated region
      $region130: #{tpu_custom_call.1} parent=72 // pred_check
        _
      $region131: #{tpu_custom_call.1} parent=72 // pred_check_branch
        %578 = sbr.rel target = $region133
      $region132: #{tpu_custom_call.1} parent=72 // pred_region
        %579 = sst [smem:[#allocation10]] [#allocation71]
        %580 = sst [smem:[#allocation11]] [#allocation70]
      $region133: #{tpu_custom_call.1} parent=72 // pred_fallthru
        _
      %582 = shalt.err (0)
      %s584 = sshll.u32 %s575, 4
      %s585 = int_to_ptr.vmem [resolvable:$true] %s584
      %587 = dma.hbm_to_vmem [thread:$0]  %s573, 16, %s585, %s576
      %s588 = sadd.s32 %s318, 15
      %s589 = sld [smem:[#allocation5 + %s588]]
      %s590 = smul.addr %s589, 16
      %s591 = scalar_lea.hbm %s1, %s590
      %s592 = sadd.s32 15, %s322
      %s593 = scalar_lea.vmem [#allocation2], %s592
      %s594 = scalar_lea.sflag [#allocation3], %s592
      // Predicated region
      $region134: #{tpu_custom_call.1} parent=72 // pred_check
        _
      $region135: #{tpu_custom_call.1} parent=72 // pred_check_branch
        %596 = sbr.rel target = $region137
      $region136: #{tpu_custom_call.1} parent=72 // pred_region
        %597 = sst [smem:[#allocation10]] [#allocation73]
        %598 = sst [smem:[#allocation11]] [#allocation72]
      $region137: #{tpu_custom_call.1} parent=72 // pred_fallthru
        _
      %600 = shalt.err (0)
      %s602 = sshll.u32 %s593, 4
      %s603 = int_to_ptr.vmem [resolvable:$true] %s602
      %605 = dma.hbm_to_vmem [thread:$0]  %s591, 16, %s603, %s594
    $region73: #{tpu_custom_call.1} parent=1 // pred_fallthru
      _
    %s606 = smul.u32 %s19, 16
    %s607 = scalar_lea.sflag [#allocation3], %s606
    %s608 = smul.u32 1, 1
    %s609 = sshll.u32 %s608, 4
    %610 = dma.done %s607, %s609
    %s611 = sadd.s32 1, %s606
    %s612 = scalar_lea.sflag [#allocation3], %s611
    %s613 = sshll.u32 %s608, 4
    %614 = dma.done %s612, %s613
    %s615 = sadd.s32 2, %s606
    %s616 = scalar_lea.sflag [#allocation3], %s615
    %s617 = sshll.u32 %s608, 4
    %618 = dma.done %s616, %s617
    %s619 = sadd.s32 3, %s606
    %s620 = scalar_lea.sflag [#allocation3], %s619
    %s621 = sshll.u32 %s608, 4
    %622 = dma.done %s620, %s621
    %s623 = sadd.s32 4, %s606
    %s624 = scalar_lea.sflag [#allocation3], %s623
    %s625 = sshll.u32 %s608, 4
    %626 = dma.done %s624, %s625
    %s627 = sadd.s32 5, %s606
    %s628 = scalar_lea.sflag [#allocation3], %s627
    %s629 = sshll.u32 %s608, 4
    %630 = dma.done %s628, %s629
    %s631 = sadd.s32 6, %s606
    %s632 = scalar_lea.sflag [#allocation3], %s631
    %s633 = sshll.u32 %s608, 4
    %634 = dma.done %s632, %s633
    %s635 = sadd.s32 7, %s606
    %s636 = scalar_lea.sflag [#allocation3], %s635
    %s637 = sshll.u32 %s608, 4
    %638 = dma.done %s636, %s637
    %s639 = sadd.s32 8, %s606
    %s640 = scalar_lea.sflag [#allocation3], %s639
    %s641 = sshll.u32 %s608, 4
    %642 = dma.done %s640, %s641
    %s643 = sadd.s32 9, %s606
    %s644 = scalar_lea.sflag [#allocation3], %s643
    %s645 = sshll.u32 %s608, 4
    %646 = dma.done %s644, %s645
    %s647 = sadd.s32 10, %s606
    %s648 = scalar_lea.sflag [#allocation3], %s647
    %s649 = sshll.u32 %s608, 4
    %650 = dma.done %s648, %s649
    %s651 = sadd.s32 11, %s606
    %s652 = scalar_lea.sflag [#allocation3], %s651
    %s653 = sshll.u32 %s608, 4
    %654 = dma.done %s652, %s653
    %s655 = sadd.s32 12, %s606
    %s656 = scalar_lea.sflag [#allocation3], %s655
    %s657 = sshll.u32 %s608, 4
    %658 = dma.done %s656, %s657
    %s659 = sadd.s32 13, %s606
    %s660 = scalar_lea.sflag [#allocation3], %s659
    %s661 = sshll.u32 %s608, 4
    %662 = dma.done %s660, %s661
    %s663 = sadd.s32 14, %s606
    %s664 = scalar_lea.sflag [#allocation3], %s663
    %s665 = sshll.u32 %s608, 4
    %666 = dma.done %s664, %s665
    %s667 = sadd.s32 15, %s606
    %s668 = scalar_lea.sflag [#allocation3], %s667
    %s669 = sshll.u32 %s608, 4
    %670 = dma.done %s668, %s669
    %s671 = scalar_lea.vmem [#allocation2], %s606
    %v672 = vld [vmem:[%s671] sm:$0xff]
    %v673 = vld [vmem:[%s671 + $0x8] sm:$0xff]
    %v674 = vmul.f32 %v672, 5.656854
    %v675 = vmul.f32 %v673, 5.656854
    %676 = vst [vmem:[#allocation6] sm:$0xff] %v674
    %677 = vst [vmem:[#allocation6 + $0x8] sm:$0xff] %v675
    // Predicated region
    $region138: #{tpu_custom_call.1} parent=1 // pred_check
      _
    $region139: #{tpu_custom_call.1} parent=1 // pred_check_branch
      %679 = sbr.rel (0) target = $region141
    $region140: #{tpu_custom_call.1} parent=1 // pred_region
      %s681 = ssub.s32 256, 256
      %682 = vsyncadd [#allocation7], %s681
      %s683 = sshll.u32 [#allocation6], 4
      %s684 = int_to_ptr.vmem [resolvable:$true] %s683
      %689 = dma.vmem_to_hbm [thread:$0]  %s684, 256, %s2, [#allocation7], 128, 128, 8
    $region141: #{tpu_custom_call.1} parent=1 // pred_fallthru
      _
    // Predicated region
    $region142: #{tpu_custom_call.1} parent=1 // pred_check
      _
    $region143: #{tpu_custom_call.1} parent=1 // pred_check_branch
      %691 = sbr.rel (0) target = $region145
    $region144: #{tpu_custom_call.1} parent=1 // pred_region
      %692 = dma.done [#allocation7], 256
    $region145: #{tpu_custom_call.1} parent=1 // pred_fallthru
      _
    %693 = vsyncpa [#allocation7], 1
  %694 = vsyncmov [#allocation3]
  %s695 = vpop.sfrf %694
  %p696 = scmp.eq.s32.totalorder %s695, 0
  %p697 = pneg %p696
  %699 = shalt.err (%p697)
  %s700 = scalar_lea.sflag [#allocation3], 1
  %701 = vsyncmov %s700
  %s702 = vpop.sfrf %701
  %p703 = scmp.eq.s32.totalorder %s702, 0
  %p704 = pneg %p703
  %706 = shalt.err (%p704)
  %s707 = scalar_lea.sflag [#allocation3], 2
  %708 = vsyncmov %s707
  %s709 = vpop.sfrf %708
  %p710 = scmp.eq.s32.totalorder %s709, 0
  %p711 = pneg %p710
  %713 = shalt.err (%p711)
  %s714 = scalar_lea.sflag [#allocation3], 3
  %715 = vsyncmov %s714
  %s716 = vpop.sfrf %715
  %p717 = scmp.eq.s32.totalorder %s716, 0
  %p718 = pneg %p717
  %720 = shalt.err (%p718)
  %s721 = scalar_lea.sflag [#allocation3], 4
  %722 = vsyncmov %s721
  %s723 = vpop.sfrf %722
  %p724 = scmp.eq.s32.totalorder %s723, 0
  %p725 = pneg %p724
  %727 = shalt.err (%p725)
  %s728 = scalar_lea.sflag [#allocation3], 5
  %729 = vsyncmov %s728
  %s730 = vpop.sfrf %729
  %p731 = scmp.eq.s32.totalorder %s730, 0
  %p732 = pneg %p731
  %734 = shalt.err (%p732)
  %s735 = scalar_lea.sflag [#allocation3], 6
  %736 = vsyncmov %s735
  %s737 = vpop.sfrf %736
  %p738 = scmp.eq.s32.totalorder %s737, 0
  %p739 = pneg %p738
  %741 = shalt.err (%p739)
  %s742 = scalar_lea.sflag [#allocation3], 7
  %743 = vsyncmov %s742
  %s744 = vpop.sfrf %743
  %p745 = scmp.eq.s32.totalorder %s744, 0
  %p746 = pneg %p745
  %748 = shalt.err (%p746)
  %s749 = scalar_lea.sflag [#allocation3], 8
  %750 = vsyncmov %s749
  %s751 = vpop.sfrf %750
  %p752 = scmp.eq.s32.totalorder %s751, 0
  %p753 = pneg %p752
  %755 = shalt.err (%p753)
  %s756 = scalar_lea.sflag [#allocation3], 9
  %757 = vsyncmov %s756
  %s758 = vpop.sfrf %757
  %p759 = scmp.eq.s32.totalorder %s758, 0
  %p760 = pneg %p759
  %762 = shalt.err (%p760)
  %s763 = scalar_lea.sflag [#allocation3], 10
  %764 = vsyncmov %s763
  %s765 = vpop.sfrf %764
  %p766 = scmp.eq.s32.totalorder %s765, 0
  %p767 = pneg %p766
  %769 = shalt.err (%p767)
  %s770 = scalar_lea.sflag [#allocation3], 11
  %771 = vsyncmov %s770
  %s772 = vpop.sfrf %771
  %p773 = scmp.eq.s32.totalorder %s772, 0
  %p774 = pneg %p773
  %776 = shalt.err (%p774)
  %s777 = scalar_lea.sflag [#allocation3], 12
  %778 = vsyncmov %s777
  %s779 = vpop.sfrf %778
  %p780 = scmp.eq.s32.totalorder %s779, 0
  %p781 = pneg %p780
  %783 = shalt.err (%p781)
  %s784 = scalar_lea.sflag [#allocation3], 13
  %785 = vsyncmov %s784
  %s786 = vpop.sfrf %785
  %p787 = scmp.eq.s32.totalorder %s786, 0
  %p788 = pneg %p787
  %790 = shalt.err (%p788)
  %s791 = scalar_lea.sflag [#allocation3], 14
  %792 = vsyncmov %s791
  %s793 = vpop.sfrf %792
  %p794 = scmp.eq.s32.totalorder %s793, 0
  %p795 = pneg %p794
  %797 = shalt.err (%p795)
  %s798 = scalar_lea.sflag [#allocation3], 15
  %799 = vsyncmov %s798
  %s800 = vpop.sfrf %799
  %p801 = scmp.eq.s32.totalorder %s800, 0
  %p802 = pneg %p801
  %804 = shalt.err (%p802)
  %s805 = scalar_lea.sflag [#allocation3], 16
  %806 = vsyncmov %s805
  %s807 = vpop.sfrf %806
  %p808 = scmp.eq.s32.totalorder %s807, 0
  %p809 = pneg %p808
  %811 = shalt.err (%p809)
  %s812 = scalar_lea.sflag [#allocation3], 17
  %813 = vsyncmov %s812
  %s814 = vpop.sfrf %813
  %p815 = scmp.eq.s32.totalorder %s814, 0
  %p816 = pneg %p815
  %818 = shalt.err (%p816)
  %s819 = scalar_lea.sflag [#allocation3], 18
  %820 = vsyncmov %s819
  %s821 = vpop.sfrf %820
  %p822 = scmp.eq.s32.totalorder %s821, 0
  %p823 = pneg %p822
  %825 = shalt.err (%p823)
  %s826 = scalar_lea.sflag [#allocation3], 19
  %827 = vsyncmov %s826
  %s828 = vpop.sfrf %827
  %p829 = scmp.eq.s32.totalorder %s828, 0
  %p830 = pneg %p829
  %832 = shalt.err (%p830)
  %s833 = scalar_lea.sflag [#allocation3], 20
  %834 = vsyncmov %s833
  %s835 = vpop.sfrf %834
  %p836 = scmp.eq.s32.totalorder %s835, 0
  %p837 = pneg %p836
  %839 = shalt.err (%p837)
  %s840 = scalar_lea.sflag [#allocation3], 21
  %841 = vsyncmov %s840
  %s842 = vpop.sfrf %841
  %p843 = scmp.eq.s32.totalorder %s842, 0
  %p844 = pneg %p843
  %846 = shalt.err (%p844)
  %s847 = scalar_lea.sflag [#allocation3], 22
  %848 = vsyncmov %s847
  %s849 = vpop.sfrf %848
  %p850 = scmp.eq.s32.totalorder %s849, 0
  %p851 = pneg %p850
  %853 = shalt.err (%p851)
  %s854 = scalar_lea.sflag [#allocation3], 23
  %855 = vsyncmov %s854
  %s856 = vpop.sfrf %855
  %p857 = scmp.eq.s32.totalorder %s856, 0
  %p858 = pneg %p857
  %860 = shalt.err (%p858)
  %s861 = scalar_lea.sflag [#allocation3], 24
  %862 = vsyncmov %s861
  %s863 = vpop.sfrf %862
  %p864 = scmp.eq.s32.totalorder %s863, 0
  %p865 = pneg %p864
  %867 = shalt.err (%p865)
  %s868 = scalar_lea.sflag [#allocation3], 25
  %869 = vsyncmov %s868
  %s870 = vpop.sfrf %869
  %p871 = scmp.eq.s32.totalorder %s870, 0
  %p872 = pneg %p871
  %874 = shalt.err (%p872)
  %s875 = scalar_lea.sflag [#allocation3], 26
  %876 = vsyncmov %s875
  %s877 = vpop.sfrf %876
  %p878 = scmp.eq.s32.totalorder %s877, 0
  %p879 = pneg %p878
  %881 = shalt.err (%p879)
  %s882 = scalar_lea.sflag [#allocation3], 27
  %883 = vsyncmov %s882
  %s884 = vpop.sfrf %883
  %p885 = scmp.eq.s32.totalorder %s884, 0
  %p886 = pneg %p885
  %888 = shalt.err (%p886)
  %s889 = scalar_lea.sflag [#allocation3], 28
  %890 = vsyncmov %s889
  %s891 = vpop.sfrf %890
  %p892 = scmp.eq.s32.totalorder %s891, 0
  %p893 = pneg %p892
  %895 = shalt.err (%p893)
  %s896 = scalar_lea.sflag [#allocation3], 29
  %897 = vsyncmov %s896
  %s898 = vpop.sfrf %897
  %p899 = scmp.eq.s32.totalorder %s898, 0
  %p900 = pneg %p899
  %902 = shalt.err (%p900)
  %s903 = scalar_lea.sflag [#allocation3], 30
  %904 = vsyncmov %s903
  %s905 = vpop.sfrf %904
  %p906 = scmp.eq.s32.totalorder %s905, 0
  %p907 = pneg %p906
  %909 = shalt.err (%p907)
  %s910 = scalar_lea.sflag [#allocation3], 31
  %911 = vsyncmov %s910
  %s912 = vpop.sfrf %911
  %p913 = scmp.eq.s32.totalorder %s912, 0
  %p914 = pneg %p913
  %916 = shalt.err (%p914)

</llo_original>
